<compile_context>
chip_gen: v5e
topology: v5e:2x2
jax: 0.10.0
libtpu: 0.0.40
codegen_flags: <defaults>
</compile_context>

<pallas_src>
import functools

import numpy as np

import jax
import jax.numpy as jnp
from jax import lax
from jax.experimental import pallas as pl
from jax.experimental.pallas import tpu as pltpu

NB = 128  # sequences per grid step: fills the 128 lanes of a vreg


# ----------------------------- small trace-time helpers ------------------------------
def _tree_reduce(fn, xs):
    xs = list(xs)
    while len(xs) > 1:
        nxt = []
        for i in range(0, len(xs) - 1, 2):
            nxt.append(fn(xs[i], xs[i + 1]))
        if len(xs) % 2:
            nxt.append(xs[-1])
        xs = nxt
    return xs[0]


def _tree_argmax(vals, idxs):
    # strict ">" keeps the lowest index on exact ties (matches np.argmax / torch first-max)
    pairs = list(zip(vals, idxs))
    while len(pairs) > 1:
        nxt = []
        for i in range(0, len(pairs) - 1, 2):
            (va, ia), (vb, ib) = pairs[i], pairs[i + 1]
            tb = vb > va
            nxt.append((jnp.where(tb, vb, va), jnp.where(tb, ib, ia)))
        if len(pairs) % 2:
            nxt.append(pairs[-1])
        pairs = nxt
    return pairs[0]


# ------------------------------------- kernel ----------------------------------------
def _crf_kernel(C, Tp, TT, NBk,
                lmax_ref,    # SMEM (Gb,) i32   scalar prefetch: per-block max length
                x_ref,       # (Hp, TT*NB) bf16/f32   x^T chunk (col = t*NB + b within block)
                w_ref,       # (Cp, Hp)    bf16/f32   decoder weight (rows >= C are zero)
                bias_ref,    # (Cp, 1)     f32        decoder bias
                lens_ref,    # (1, NB)     i32        per-lane sequence length
                crf_ref,     # (Rp, NB)    f32        rows: trans[cp*C+cn], start[C*C+c], end[C*C+C+c]
                feat_ref,    # out (Cp, Tp*NB) f32    transposed features == DP emission table
                logz_ref,    # out (1, NB)     f32    log partition (CRF denominator)
                lbl_ref,     # out (1, Tp*NB)  i32    Viterbi labels, lane t*NB + b (0-padded)
                bp_ref):     # scratch VMEM (Cp, Tp*NB) i32   Viterbi backpointers
    g = pl.program_id(0)
    tc = pl.program_id(1)
    n_tc = pl.num_programs(1)
    TTNB = TT * NBk

    # ------------- decoder matmul for this time chunk (runs every grid step) -------------
    fbT = jnp.dot(w_ref[...], x_ref[...], preferred_element_type=jnp.float32)  # (Cp, TTNB)
    fbT = fbT + jnp.broadcast_to(bias_ref[...], fbT.shape)
    col0 = pl.multiple_of(tc * TTNB, NBk)
    feat_ref[:, pl.ds(col0, TTNB)] = fbT

    # ------------- fused forward + Viterbi DP on the last chunk ---------------------------
    @pl.when(tc == n_tc - 1)
    def _dp():
        l_col = lens_ref[...]                              # (1, NB) i32
        l_max = lmax_ref[g]                                # scalar i32

        # hoisted loop invariants: (1, NB) lane-broadcast rows of the CRF parameters
        t_bc = [[crf_ref[cp * C + cn:cp * C + cn + 1, :] for cn in range(C)]
                for cp in range(C)]
        start_bc = [crf_ref[C * C + c:C * C + c + 1, :] for c in range(C)]
        end_bc = [crf_ref[C * C + C + c:C * C + C + c + 1, :] for c in range(C)]
        idx_const = [jnp.full((1, NBk), c, jnp.int32) for c in range(C)]

        def emit_row(off, c):
            return feat_ref[c:c + 1, pl.ds(off, NBk)]      # contiguous (1, NB) f32

        # t = 0 init (identical for forward and Viterbi)
        init = tuple(emit_row(0, c) + start_bc[c] for c in range(C))

        def dp_body(t, carry):
            alpha, score = carry                           # tuples of C (1, NB) f32
            off = pl.multiple_of(t * NBk, NBk)
            emit = [emit_row(off, c) for c in range(C)]
            active = t < l_col                             # (1, NB) bool, per-lane length mask
            new_alpha, new_score = [], []
            for cn in range(C):
                cf = [alpha[cp] + t_bc[cp][cn] for cp in range(C)]
                cv = [score[cp] + t_bc[cp][cn] for cp in range(C)]
                m_f = _tree_reduce(jnp.maximum, cf)
                m_v, arg_v = _tree_argmax(cv, idx_const)
                s_f = _tree_reduce(lambda a, b: a + b, [jnp.exp(v - m_f) for v in cf])
                a_new = m_f + jnp.log(s_f) + emit[cn]
                s_new = m_v + emit[cn]
                new_alpha.append(jnp.where(active, a_new, alpha[cn]))
                new_score.append(jnp.where(active, s_new, score[cn]))
                bp_ref[cn:cn + 1, pl.ds(off, NBk)] = arg_v  # backpointers (never zero-inited)
            return tuple(new_alpha), tuple(new_score)

        alpha, score = lax.fori_loop(1, l_max, dp_body, (init, init))

        # CRF log partition (denominator)
        stops = [alpha[c] + end_bc[c] for c in range(C)]
        m_s = _tree_reduce(jnp.maximum, stops)
        s_s = _tree_reduce(lambda a, b: a + b, [jnp.exp(v - m_s) for v in stops])
        logz_ref[...] = m_s + jnp.log(s_s)

        # Viterbi END transition + in-kernel backtrack
        fin = [score[c] + end_bc[c] for c in range(C)]
        _, end_tag = _tree_argmax(fin, idx_const)          # (1, NB) i32

        lbl_ref[...] = jnp.zeros((1, Tp * NBk), jnp.int32)

        def bt_body(i, cur):
            p = l_max - 1 - i
            off = pl.multiple_of(p * NBk, NBk)
            active = p < l_col
            at_last = p == l_col - 1
            cur = jnp.where(at_last, end_tag, cur)
            lbl_ref[:, pl.ds(off, NBk)] = jnp.where(active, cur, 0)
            prev = bp_ref[0:1, pl.ds(off, NBk)]
            for c in range(1, C):
                prev = jnp.where(cur == c, bp_ref[c:c + 1, pl.ds(off, NBk)], prev)
            return jnp.where(jnp.logical_and(active, p >= 1), prev, cur)

        lax.fori_loop(0, l_max, bt_body, end_tag)


# --------------------------------- host-side wrapper ---------------------------------
def init_params(hidden_features, out_features, key):
    H, C = hidden_features, out_features
    ks = jax.random.split(key, 5)
    return dict(
        w_dec=jax.random.normal(ks[0], (C, H), jnp.float32) / jnp.sqrt(float(H)),
        b_dec=jax.random.normal(ks[1], (C,), jnp.float32) * 0.1,
        transitions=jax.random.normal(ks[2], (C, C), jnp.float32) * 0.1,
        start=jax.random.normal(ks[3], (C,), jnp.float32) * 0.1,
        end=jax.random.normal(ks[4], (C,), jnp.float32) * 0.1,
    )


def crf_layer_forward(model_inputs, params, *, input_name, output_name,
                      labels_name, out_features, matmul_dtype=jnp.bfloat16):
    if output_name in model_inputs:
        raise RuntimeError(f"Never modify an existing key! ({output_name})")
    if input_name not in model_inputs:
        raise RuntimeError(f"Key not available. ({output_name})")

    x = model_inputs[input_name]                               # [B, T, H]
    mask = model_inputs["attention_mask"]                      # [B, T] prefix mask
    labels = model_inputs[labels_name].astype(jnp.int32)       # [B, T]

    B, T, H = x.shape
    C = out_features
    Cp = ((C + 7) // 8) * 8
    Hp = ((H + 15) // 16) * 16
    Tp = pl.cdiv(T, 8) * 8
    Bp = pl.cdiv(B, NB) * NB
    Gb = Bp // NB
    Rp = ((C * C + 2 * C + 7) // 8) * 8

    # time-chunk size for streaming the x tile (keep the bf16 chunk ~<= 4 MiB)
    itemsize = int(np.dtype(matmul_dtype).itemsize)
    bytes_per_t = Hp * NB * itemsize
    tt_cap = max(8, (4 * 1024 * 1024) // max(1, bytes_per_t))
    TT = 1
    for d in range(1, Tp + 1):
        if Tp % d == 0 and d <= tt_cap:
            TT = d
    n_tc = Tp // TT
    TTNB = TT * NB

    lengths = jnp.sum(mask.astype(jnp.int32), axis=1)          # (B,)
    lenp = jnp.zeros((Bp,), jnp.int32).at[:B].set(lengths)
    lens_lane = lenp.reshape(Gb, 1, NB)
    lmax_blk = jnp.max(lenp.reshape(Gb, NB), axis=1).astype(jnp.int32)

    # x: cast to the matmul dtype FIRST, then pad and reorder to (H, token) columns t*NB+b
    x_pad = jnp.zeros((Bp, Tp, Hp), matmul_dtype).at[:B, :T, :H].set(x.astype(matmul_dtype))
    xT = x_pad.reshape(Gb, NB, Tp, Hp).transpose(3, 0, 2, 1).reshape(Hp, Gb * Tp * NB)

    Wp = jnp.zeros((Cp, Hp), jnp.float32).at[:C, :H].set(params["w_dec"]).astype(matmul_dtype)
    bias_p = jnp.zeros((Cp, 1), jnp.float32).at[:C, 0].set(params["b_dec"])

    # lane-broadcast CRF parameters: rows [cp*C+cn]=trans, [C*C+c]=start, [C*C+C+c]=end
    par_vec = jnp.concatenate([params["transitions"].reshape(-1),
                               params["start"].reshape(-1),
                               params["end"].reshape(-1)]).astype(jnp.float32)
    crf_b = jnp.zeros((Rp, NB), jnp.float32).at[:C * C + 2 * C, :].set(
        jnp.broadcast_to(par_vec[:, None], (C * C + 2 * C, NB)))

    kernel = functools.partial(_crf_kernel, C, Tp, TT, NB)

    grid_spec = pltpu.PrefetchScalarGridSpec(
        num_scalar_prefetch=1,
        grid=(Gb, n_tc),
        in_specs=[
            pl.BlockSpec((Hp, TTNB), lambda g, tc, lmax: (0, g * n_tc + tc)),   # x^T chunk
            pl.BlockSpec((Cp, Hp), lambda g, tc, lmax: (0, 0)),                 # decoder W
            pl.BlockSpec((Cp, 1), lambda g, tc, lmax: (0, 0)),                  # decoder bias
            pl.BlockSpec((None, 1, NB), lambda g, tc, lmax: (g, 0, 0)),         # lengths
            pl.BlockSpec((Rp, NB), lambda g, tc, lmax: (0, 0)),                 # CRF params
        ],
        out_specs=[
            pl.BlockSpec((None, Cp, Tp * NB), lambda g, tc, lmax: (g, 0, 0)),   # features^T
            pl.BlockSpec((None, 1, NB), lambda g, tc, lmax: (g, 0, 0)),         # log partition
            pl.BlockSpec((None, 1, Tp * NB), lambda g, tc, lmax: (g, 0, 0)),    # Viterbi labels
        ],
        scratch_shapes=[pltpu.VMEM((Cp, Tp * NB), jnp.int32)],                  # backpointers
    )

    est = (2 * Hp * TTNB * itemsize + 2 * Cp * Tp * NB * 4 + Cp * Tp * NB * 4
           + 2 * 8 * Tp * NB * 4 + 2 * Cp * Hp * itemsize + Rp * NB * 4 + 4 * 8 * NB * 4)
    vmem_limit = int(min(96 * 2**20, max(32 * 2**20, est + (4 << 20))))

    featT, logz, lblf = pl.pallas_call(
        kernel,
        grid_spec=grid_spec,
        out_shape=(
            jax.ShapeDtypeStruct((Gb, Cp, Tp * NB), jnp.float32),
            jax.ShapeDtypeStruct((Gb, 1, NB), jnp.float32),
            jax.ShapeDtypeStruct((Gb, 1, Tp * NB), jnp.int32),
        ),
        compiler_params=pltpu.CompilerParams(
            dimension_semantics=("parallel", "arbitrary"),  # v7x: batch blocks across 2 TCs
            vmem_limit_bytes=vmem_limit,
        ),
    )(lmax_blk, xT, Wp, bias_p, lens_lane, crf_b)

    # --- un-transpose the small outputs (C << H, so this HBM traffic is negligible) ---
    feats = featT.reshape(Gb, Cp, Tp, NB).transpose(0, 3, 2, 1).reshape(Bp, Tp, Cp)[:B, :T, :C]
    pred_labels = lblf.reshape(Gb, Tp, NB).transpose(0, 2, 1).reshape(Bp, Tp)[:B, :T]
    log_den = logz.reshape(Bp)[:B]
    # TODO(synk): torch reference returns int64 labels; JAX default (x64 off) keeps int32.

    # --- gold-path (numerator) score: tiny O(B*T) gather work, done in plain JAX ---
    maskf = mask.astype(jnp.float32)
    emit_gold = jnp.take_along_axis(feats, labels[..., None], axis=2)[..., 0]
    emit_term = jnp.sum(emit_gold * maskf, axis=1)
    if T > 1:
        trans_gold = params["transitions"][labels[:, :-1], labels[:, 1:]]
        trans_term = jnp.sum(trans_gold * maskf[:, 1:], axis=1)
    else:
        trans_term = jnp.zeros((B,), jnp.float32)
    start_term = params["start"][labels[:, 0]]
    last_idx = jnp.maximum(lengths - 1, 0)
    last_tag = jnp.take_along_axis(labels, last_idx[:, None], axis=1)[:, 0]
    end_term = params["end"][last_tag]
    log_num = emit_term + trans_term + start_term + end_term
    loss = -jnp.sum(log_num - log_den)          # -(sum_b log p(gold_b | x_b))

    out = dict(model_inputs)
    out[output_name] = feats
    out[output_name + "_label"] = pred_labels
    out["CRF_loss"] = loss
    return out


# ------------------------- numpy reference (for self-checking) ------------------------
def _np_logsumexp(a, axis):
    m = np.max(a, axis=axis, keepdims=True)
    return (m + np.log(np.sum(np.exp(a - m), axis=axis, keepdims=True))).squeeze(axis)


def _crf_reference_numpy(feats, lengths, labels, trans, start, end):
    B, T, C = feats.shape
    total_ll = 0.0
    pred = np.zeros((B, T), np.int64)
    for b in range(B):
        L = int(lengths[b])
        e = feats[b, :L]
        y = labels[b, :L]
        num = float(start[y[0]]) + float(end[y[-1]]) + float(e[np.arange(L), y].sum())
        for t in range(1, L):
            num += float(trans[y[t - 1], y[t]])
        alpha = start + e[0]
        for t in range(1, L):
            alpha = _np_logsumexp(alpha[:, None] + trans, axis=0) + e[t]
        den = float(_np_logsumexp(alpha + end, axis=0))
        total_ll += num - den
        score = start + e[0]
        bps = np.zeros((L, C), np.int64)
        for t in range(1, L):
            cand = score[:, None] + trans
            bps[t] = np.argmax(cand, axis=0)
            score = cand[bps[t], np.arange(C)] + e[t]
        tag = int(np.argmax(score + end))
        path = [tag]
        for t in range(L - 1, 0, -1):
            tag = int(bps[t, tag])
            path.append(tag)
        pred[b, :L] = np.array(path[::-1], np.int64)
    return -total_ll, pred


if __name__ == "__main__":
    B, T, H, C = 2, 8, 32, 6                   # batch, seq, hidden_features, out_features
    key = jax.random.PRNGKey(0)
    kp, kx, kl = jax.random.split(key, 3)

    params = init_params(H, C, kp)
    x = jax.random.normal(kx, (B, T, H), jnp.float32)
    seq_lens = jnp.array([T, 5], jnp.int32)
    attention_mask = (jnp.arange(T)[None, :] < seq_lens[:, None]).astype(jnp.int32)
    gold_labels = jax.random.randint(kl, (B, T), 0, C, jnp.int32)

    model_inputs = {"hidden": x, "attention_mask": attention_mask, "labels": gold_labels}

    out = crf_layer_forward(model_inputs, params,
                            input_name="hidden", output_name="crf_out",
                            labels_name="labels", out_features=C)

    feats, pred, loss = out["crf_out"], out["crf_out_label"], out["CRF_loss"]
    jax.block_until_ready((feats, pred, loss))

    assert feats.shape == (B, T, C)
    assert pred.shape == (B, T)
    assert bool(jnp.isfinite(loss))
    assert bool(jnp.all((pred >= 0) & (pred < C)))

    # decoder features vs f32 reference (bf16 matmul -> loose tolerance)
    f_ref = np.asarray(x) @ np.asarray(params["w_dec"]).T + np.asarray(params["b_dec"])
    assert np.allclose(np.asarray(feats), f_ref, atol=0.2, rtol=0.02)

    # CRF loss / Viterbi decode vs numpy reference built on the kernel's own features
    loss_ref, pred_ref = _crf_reference_numpy(
        np.asarray(feats, np.float32), np.asarray(seq_lens), np.asarray(gold_labels),
        np.asarray(params["transitions"], np.float32),
        np.asarray(params["start"], np.float32), np.asarray(params["end"], np.float32))
    assert np.array_equal(np.asarray(pred), pred_ref)
    assert abs(float(loss) - loss_ref) <= 1e-2 * max(1.0, abs(loss_ref))

    print("KERNEL_OK")
</pallas_src>

<mosaic_0001>
module attributes {stable_mosaic.version = 11 : i64} {
  func.func @_crf_kernel(%arg0: i32, %arg1: i32, %arg2: memref<1xi32, #tpu.memory_space<smem>>, %arg3: memref<32x1024xbf16, #tpu.memory_space<vmem>>, %arg4: memref<8x32xbf16, #tpu.memory_space<vmem>>, %arg5: memref<8x1xf32, #tpu.memory_space<vmem>>, %arg6: memref<1x1x128xi32, #tpu.memory_space<vmem>>, %arg7: memref<48x128xf32, #tpu.memory_space<vmem>>, %arg8: memref<1x8x1024xf32, #tpu.memory_space<vmem>>, %arg9: memref<1x1x128xf32, #tpu.memory_space<vmem>>, %arg10: memref<1x1x1024xi32, #tpu.memory_space<vmem>>, %arg11: memref<8x1024xi32, #tpu.memory_space<vmem>>) attributes {dimension_semantics = [#tpu.dimension_semantics<parallel>, #tpu.dimension_semantics<arbitrary>], iteration_bounds = array<i64: 1, 1>, scalar_prefetch = 1 : i64, scratch_operands = 1 : i64, tpu.core_type = #tpu.core_type<tc>, window_params = [{transform_indices = @transform_0, window_bounds = array<i64: 32, 1024>}, {pipeline_mode = #tpu.pipeline_mode<synchronous>, transform_indices = @transform_1, window_bounds = array<i64: 8, 32>}, {pipeline_mode = #tpu.pipeline_mode<synchronous>, transform_indices = @transform_2, window_bounds = array<i64: 8, 1>}, {transform_indices = @transform_3, window_bounds = array<i64: 1, 1, 128>}, {pipeline_mode = #tpu.pipeline_mode<synchronous>, transform_indices = @transform_4, window_bounds = array<i64: 48, 128>}, {transform_indices = @transform_5, window_bounds = array<i64: 1, 8, 1024>}, {transform_indices = @transform_6, window_bounds = array<i64: 1, 1, 128>}, {transform_indices = @transform_7, window_bounds = array<i64: 1, 1, 1024>}]} {
    %c0 = arith.constant 0 : index
    %c0_0 = arith.constant 0 : index
    %0 = vector.load %arg4[%c0, %c0_0] : memref<8x32xbf16, #tpu.memory_space<vmem>>, vector<8x32xbf16>
    %c0_1 = arith.constant 0 : index
    %c0_2 = arith.constant 0 : index
    %1 = vector.load %arg3[%c0_1, %c0_2] : memref<32x1024xbf16, #tpu.memory_space<vmem>>, vector<32x1024xbf16>
    %cst = arith.constant dense<0.000000e+00> : vector<8x1024xf32>
    %2 = tpu.matmul %0, %1, %cst {dimension_numbers = #tpu.dot_dimension_numbers<[1], [0], [0], [1], [0, 0, 1, 1], [], []>} : vector<8x32xbf16>, vector<32x1024xbf16>, vector<8x1024xf32> -> vector<8x1024xf32>
    %c0_3 = arith.constant 0 : index
    %c0_4 = arith.constant 0 : index
    %3 = vector.load %arg5[%c0_3, %c0_4] : memref<8x1xf32, #tpu.memory_space<vmem>>, vector<8x1xf32>
    %4 = vector.shape_cast %3 : vector<8x1xf32> to vector<8x1xf32>
    %5 = vector.broadcast %4 : vector<8x1xf32> to vector<8x1024xf32>
    %6 = arith.addf %2, %5 : vector<8x1024xf32>
    %c1024_i32 = arith.constant 1024 : i32
    %7 = arith.muli %arg1, %c1024_i32 : i32
    %8 = tpu.assume_multiple %7, 128 : i32
    %c0_5 = arith.constant 0 : index
    %c0_6 = arith.constant 0 : index
    %9 = arith.index_cast %8 : i32 to index
    %10 = vector.load %arg8[%c0_5, %c0_6, %9] : memref<1x8x1024xf32, #tpu.memory_space<vmem>>, vector<1x8x1024xf32>
    %11 = vector.shape_cast %10 : vector<1x8x1024xf32> to vector<8x1024xf32>
    %12 = vector.shape_cast %6 : vector<8x1024xf32> to vector<1x8x1024xf32>
    tpu.vector_store %arg8[%c0_5, %c0_6, %9], %12 {strides = array<i32>} : memref<1x8x1024xf32, #tpu.memory_space<vmem>>, vector<1x8x1024xf32>,
    %c0_i32 = arith.constant 0 : i32
    %13 = arith.cmpi eq, %arg1, %c0_i32 : i32
    %14 = arith.extui %13 : i1 to i32
    %c0_i32_7 = arith.constant 0 : i32
    %15 = arith.cmpi ne, %14, %c0_i32_7 : i32
    scf.if %15 {
      %c0_8 = arith.constant 0 : index
      %c0_9 = arith.constant 0 : index
      %c0_10 = arith.constant 0 : index
      %16 = vector.load %arg6[%c0_8, %c0_9, %c0_10] : memref<1x1x128xi32, #tpu.memory_space<vmem>>, vector<1x1x128xi32>
      %17 = vector.shape_cast %16 : vector<1x1x128xi32> to vector<1x128xi32>
      %18 = arith.index_cast %arg0 : i32 to index
      %19 = memref.load %arg2[%18] : memref<1xi32, #tpu.memory_space<smem>>
      %c0_11 = arith.constant 0 : index
      %c0_12 = arith.constant 0 : index
      %20 = vector.load %arg7[%c0_11, %c0_12] : memref<48x128xf32, #tpu.memory_space<vmem>>, vector<1x128xf32>
      %c1 = arith.constant 1 : index
      %c0_13 = arith.constant 0 : index
      %21 = vector.load %arg7[%c1, %c0_13] : memref<48x128xf32, #tpu.memory_space<vmem>>, vector<1x128xf32>
      %c2 = arith.constant 2 : index
      %c0_14 = arith.constant 0 : index
      %22 = vector.load %arg7[%c2, %c0_14] : memref<48x128xf32, #tpu.memory_space<vmem>>, vector<1x128xf32>
      %c3 = arith.constant 3 : index
      %c0_15 = arith.constant 0 : index
      %23 = vector.load %arg7[%c3, %c0_15] : memref<48x128xf32, #tpu.memory_space<vmem>>, vector<1x128xf32>
      %c4 = arith.constant 4 : index
      %c0_16 = arith.constant 0 : index
      %24 = vector.load %arg7[%c4, %c0_16] : memref<48x128xf32, #tpu.memory_space<vmem>>, vector<1x128xf32>
      %c5 = arith.constant 5 : index
      %c0_17 = arith.constant 0 : index
      %25 = vector.load %arg7[%c5, %c0_17] : memref<48x128xf32, #tpu.memory_space<vmem>>, vector<1x128xf32>
      %c6 = arith.constant 6 : index
      %c0_18 = arith.constant 0 : index
      %26 = vector.load %arg7[%c6, %c0_18] : memref<48x128xf32, #tpu.memory_space<vmem>>, vector<1x128xf32>
      %c7 = arith.constant 7 : index
      %c0_19 = arith.constant 0 : index
      %27 = vector.load %arg7[%c7, %c0_19] : memref<48x128xf32, #tpu.memory_space<vmem>>, vector<1x128xf32>
      %c8 = arith.constant 8 : index
      %c0_20 = arith.constant 0 : index
      %28 = vector.load %arg7[%c8, %c0_20] : memref<48x128xf32, #tpu.memory_space<vmem>>, vector<1x128xf32>
      %c9 = arith.constant 9 : index
      %c0_21 = arith.constant 0 : index
      %29 = vector.load %arg7[%c9, %c0_21] : memref<48x128xf32, #tpu.memory_space<vmem>>, vector<1x128xf32>
      %c10 = arith.constant 10 : index
      %c0_22 = arith.constant 0 : index
      %30 = vector.load %arg7[%c10, %c0_22] : memref<48x128xf32, #tpu.memory_space<vmem>>, vector<1x128xf32>
      %c11 = arith.constant 11 : index
      %c0_23 = arith.constant 0 : index
      %31 = vector.load %arg7[%c11, %c0_23] : memref<48x128xf32, #tpu.memory_space<vmem>>, vector<1x128xf32>
      %c12 = arith.constant 12 : index
      %c0_24 = arith.constant 0 : index
      %32 = vector.load %arg7[%c12, %c0_24] : memref<48x128xf32, #tpu.memory_space<vmem>>, vector<1x128xf32>
      %c13 = arith.constant 13 : index
      %c0_25 = arith.constant 0 : index
      %33 = vector.load %arg7[%c13, %c0_25] : memref<48x128xf32, #tpu.memory_space<vmem>>, vector<1x128xf32>
      %c14 = arith.constant 14 : index
      %c0_26 = arith.constant 0 : index
      %34 = vector.load %arg7[%c14, %c0_26] : memref<48x128xf32, #tpu.memory_space<vmem>>, vector<1x128xf32>
      %c15 = arith.constant 15 : index
      %c0_27 = arith.constant 0 : index
      %35 = vector.load %arg7[%c15, %c0_27] : memref<48x128xf32, #tpu.memory_space<vmem>>, vector<1x128xf32>
      %c16 = arith.constant 16 : index
      %c0_28 = arith.constant 0 : index
      %36 = vector.load %arg7[%c16, %c0_28] : memref<48x128xf32, #tpu.memory_space<vmem>>, vector<1x128xf32>
      %c17 = arith.constant 17 : index
      %c0_29 = arith.constant 0 : index
      %37 = vector.load %arg7[%c17, %c0_29] : memref<48x128xf32, #tpu.memory_space<vmem>>, vector<1x128xf32>
      %c18 = arith.constant 18 : index
      %c0_30 = arith.constant 0 : index
      %38 = vector.load %arg7[%c18, %c0_30] : memref<48x128xf32, #tpu.memory_space<vmem>>, vector<1x128xf32>
      %c19 = arith.constant 19 : index
      %c0_31 = arith.constant 0 : index
      %39 = vector.load %arg7[%c19, %c0_31] : memref<48x128xf32, #tpu.memory_space<vmem>>, vector<1x128xf32>
      %c20 = arith.constant 20 : index
      %c0_32 = arith.constant 0 : index
      %40 = vector.load %arg7[%c20, %c0_32] : memref<48x128xf32, #tpu.memory_space<vmem>>, vector<1x128xf32>
      %c21 = arith.constant 21 : index
      %c0_33 = arith.constant 0 : index
      %41 = vector.load %arg7[%c21, %c0_33] : memref<48x128xf32, #tpu.memory_space<vmem>>, vector<1x128xf32>
      %c22 = arith.constant 22 : index
      %c0_34 = arith.constant 0 : index
      %42 = vector.load %arg7[%c22, %c0_34] : memref<48x128xf32, #tpu.memory_space<vmem>>, vector<1x128xf32>
      %c23 = arith.constant 23 : index
      %c0_35 = arith.constant 0 : index
      %43 = vector.load %arg7[%c23, %c0_35] : memref<48x128xf32, #tpu.memory_space<vmem>>, vector<1x128xf32>
      %c24 = arith.constant 24 : index
      %c0_36 = arith.constant 0 : index
      %44 = vector.load %arg7[%c24, %c0_36] : memref<48x128xf32, #tpu.memory_space<vmem>>, vector<1x128xf32>
      %c25 = arith.constant 25 : index
      %c0_37 = arith.constant 0 : index
      %45 = vector.load %arg7[%c25, %c0_37] : memref<48x128xf32, #tpu.memory_space<vmem>>, vector<1x128xf32>
      %c26 = arith.constant 26 : index
      %c0_38 = arith.constant 0 : index
      %46 = vector.load %arg7[%c26, %c0_38] : memref<48x128xf32, #tpu.memory_space<vmem>>, vector<1x128xf32>
      %c27 = arith.constant 27 : index
      %c0_39 = arith.constant 0 : index
      %47 = vector.load %arg7[%c27, %c0_39] : memref<48x128xf32, #tpu.memory_space<vmem>>, vector<1x128xf32>
      %c28 = arith.constant 28 : index
      %c0_40 = arith.constant 0 : index
      %48 = vector.load %arg7[%c28, %c0_40] : memref<48x128xf32, #tpu.memory_space<vmem>>, vector<1x128xf32>
      %c29 = arith.constant 29 : index
      %c0_41 = arith.constant 0 : index
      %49 = vector.load %arg7[%c29, %c0_41] : memref<48x128xf32, #tpu.memory_space<vmem>>, vector<1x128xf32>
      %c30 = arith.constant 30 : index
      %c0_42 = arith.constant 0 : index
      %50 = vector.load %arg7[%c30, %c0_42] : memref<48x128xf32, #tpu.memory_space<vmem>>, vector<1x128xf32>
      %c31 = arith.constant 31 : index
      %c0_43 = arith.constant 0 : index
      %51 = vector.load %arg7[%c31, %c0_43] : memref<48x128xf32, #tpu.memory_space<vmem>>, vector<1x128xf32>
      %c32 = arith.constant 32 : index
      %c0_44 = arith.constant 0 : index
      %52 = vector.load %arg7[%c32, %c0_44] : memref<48x128xf32, #tpu.memory_space<vmem>>, vector<1x128xf32>
      %c33 = arith.constant 33 : index
      %c0_45 = arith.constant 0 : index
      %53 = vector.load %arg7[%c33, %c0_45] : memref<48x128xf32, #tpu.memory_space<vmem>>, vector<1x128xf32>
      %c34 = arith.constant 34 : index
      %c0_46 = arith.constant 0 : index
      %54 = vector.load %arg7[%c34, %c0_46] : memref<48x128xf32, #tpu.memory_space<vmem>>, vector<1x128xf32>
      %c35 = arith.constant 35 : index
      %c0_47 = arith.constant 0 : index
      %55 = vector.load %arg7[%c35, %c0_47] : memref<48x128xf32, #tpu.memory_space<vmem>>, vector<1x128xf32>
      %c36 = arith.constant 36 : index
      %c0_48 = arith.constant 0 : index
      %56 = vector.load %arg7[%c36, %c0_48] : memref<48x128xf32, #tpu.memory_space<vmem>>, vector<1x128xf32>
      %c37 = arith.constant 37 : index
      %c0_49 = arith.constant 0 : index
      %57 = vector.load %arg7[%c37, %c0_49] : memref<48x128xf32, #tpu.memory_space<vmem>>, vector<1x128xf32>
      %c38 = arith.constant 38 : index
      %c0_50 = arith.constant 0 : index
      %58 = vector.load %arg7[%c38, %c0_50] : memref<48x128xf32, #tpu.memory_space<vmem>>, vector<1x128xf32>
      %c39 = arith.constant 39 : index
      %c0_51 = arith.constant 0 : index
      %59 = vector.load %arg7[%c39, %c0_51] : memref<48x128xf32, #tpu.memory_space<vmem>>, vector<1x128xf32>
      %c40 = arith.constant 40 : index
      %c0_52 = arith.constant 0 : index
      %60 = vector.load %arg7[%c40, %c0_52] : memref<48x128xf32, #tpu.memory_space<vmem>>, vector<1x128xf32>
      %c41 = arith.constant 41 : index
      %c0_53 = arith.constant 0 : index
      %61 = vector.load %arg7[%c41, %c0_53] : memref<48x128xf32, #tpu.memory_space<vmem>>, vector<1x128xf32>
      %c42 = arith.constant 42 : index
      %c0_54 = arith.constant 0 : index
      %62 = vector.load %arg7[%c42, %c0_54] : memref<48x128xf32, #tpu.memory_space<vmem>>, vector<1x128xf32>
      %c43 = arith.constant 43 : index
      %c0_55 = arith.constant 0 : index
      %63 = vector.load %arg7[%c43, %c0_55] : memref<48x128xf32, #tpu.memory_space<vmem>>, vector<1x128xf32>
      %c44 = arith.constant 44 : index
      %c0_56 = arith.constant 0 : index
      %64 = vector.load %arg7[%c44, %c0_56] : memref<48x128xf32, #tpu.memory_space<vmem>>, vector<1x128xf32>
      %c45 = arith.constant 45 : index
      %c0_57 = arith.constant 0 : index
      %65 = vector.load %arg7[%c45, %c0_57] : memref<48x128xf32, #tpu.memory_space<vmem>>, vector<1x128xf32>
      %c46 = arith.constant 46 : index
      %c0_58 = arith.constant 0 : index
      %66 = vector.load %arg7[%c46, %c0_58] : memref<48x128xf32, #tpu.memory_space<vmem>>, vector<1x128xf32>
      %c47 = arith.constant 47 : index
      %c0_59 = arith.constant 0 : index
      %67 = vector.load %arg7[%c47, %c0_59] : memref<48x128xf32, #tpu.memory_space<vmem>>, vector<1x128xf32>
      %c0_i32_60 = arith.constant 0 : i32
      %68 = vector.broadcast %c0_i32_60 : i32 to vector<1x128xi32>
      %c1_i32 = arith.constant 1 : i32
      %69 = vector.broadcast %c1_i32 : i32 to vector<1x128xi32>
      %c2_i32 = arith.constant 2 : i32
      %70 = vector.broadcast %c2_i32 : i32 to vector<1x128xi32>
      %c3_i32 = arith.constant 3 : i32
      %71 = vector.broadcast %c3_i32 : i32 to vector<1x128xi32>
      %c4_i32 = arith.constant 4 : i32
      %72 = vector.broadcast %c4_i32 : i32 to vector<1x128xi32>
      %c5_i32 = arith.constant 5 : i32
      %73 = vector.broadcast %c5_i32 : i32 to vector<1x128xi32>
      %c0_61 = arith.constant 0 : index
      %c0_62 = arith.constant 0 : index
      %c0_63 = arith.constant 0 : index
      %74 = vector.load %arg8[%c0_61, %c0_62, %c0_63] : memref<1x8x1024xf32, #tpu.memory_space<vmem>>, vector<1x1x128xf32>
      %75 = vector.shape_cast %74 : vector<1x1x128xf32> to vector<1x128xf32>
      %76 = arith.addf %75, %56 : vector<1x128xf32>
      %c0_64 = arith.constant 0 : index
      %c1_65 = arith.constant 1 : index
      %c0_66 = arith.constant 0 : index
      %77 = vector.load %arg8[%c0_64, %c1_65, %c0_66] : memref<1x8x1024xf32, #tpu.memory_space<vmem>>, vector<1x1x128xf32>
      %78 = vector.shape_cast %77 : vector<1x1x128xf32> to vector<1x128xf32>
      %79 = arith.addf %78, %57 : vector<1x128xf32>
      %c0_67 = arith.constant 0 : index
      %c2_68 = arith.constant 2 : index
      %c0_69 = arith.constant 0 : index
      %80 = vector.load %arg8[%c0_67, %c2_68, %c0_69] : memref<1x8x1024xf32, #tpu.memory_space<vmem>>, vector<1x1x128xf32>
      %81 = vector.shape_cast %80 : vector<1x1x128xf32> to vector<1x128xf32>
      %82 = arith.addf %81, %58 : vector<1x128xf32>
      %c0_70 = arith.constant 0 : index
      %c3_71 = arith.constant 3 : index
      %c0_72 = arith.constant 0 : index
      %83 = vector.load %arg8[%c0_70, %c3_71, %c0_72] : memref<1x8x1024xf32, #tpu.memory_space<vmem>>, vector<1x1x128xf32>
      %84 = vector.shape_cast %83 : vector<1x1x128xf32> to vector<1x128xf32>
      %85 = arith.addf %84, %59 : vector<1x128xf32>
      %c0_73 = arith.constant 0 : index
      %c4_74 = arith.constant 4 : index
      %c0_75 = arith.constant 0 : index
      %86 = vector.load %arg8[%c0_73, %c4_74, %c0_75] : memref<1x8x1024xf32, #tpu.memory_space<vmem>>, vector<1x1x128xf32>
      %87 = vector.shape_cast %86 : vector<1x1x128xf32> to vector<1x128xf32>
      %88 = arith.addf %87, %60 : vector<1x128xf32>
      %c0_76 = arith.constant 0 : index
      %c5_77 = arith.constant 5 : index
      %c0_78 = arith.constant 0 : index
      %89 = vector.load %arg8[%c0_76, %c5_77, %c0_78] : memref<1x8x1024xf32, #tpu.memory_space<vmem>>, vector<1x1x128xf32>
      %90 = vector.shape_cast %89 : vector<1x1x128xf32> to vector<1x128xf32>
      %91 = arith.addf %90, %61 : vector<1x128xf32>
      %c1_i32_79 = arith.constant 1 : i32
      %92 = arith.subi %19, %c1_i32_79 : i32
      %93 = arith.addi %c1_i32_79, %92 : i32
      %c1_i32_80 = arith.constant 1 : i32
      %94:12 = scf.for %arg12 = %c1_i32_79 to %93 step %c1_i32_80 iter_args(%arg13 = %76, %arg14 = %79, %arg15 = %82, %arg16 = %85, %arg17 = %88, %arg18 = %91, %arg19 = %76, %arg20 = %79, %arg21 = %82, %arg22 = %85, %arg23 = %88, %arg24 = %91) -> (vector<1x128xf32>, vector<1x128xf32>, vector<1x128xf32>, vector<1x128xf32>, vector<1x128xf32>, vector<1x128xf32>, vector<1x128xf32>, vector<1x128xf32>, vector<1x128xf32>, vector<1x128xf32>, vector<1x128xf32>, vector<1x128xf32>)  : i32 {
        %c128_i32 = arith.constant 128 : i32
        %155 = arith.muli %arg12, %c128_i32 : i32
        %156 = tpu.assume_multiple %155, 128 : i32
        %c0_90 = arith.constant 0 : index
        %c0_91 = arith.constant 0 : index
        %157 = arith.index_cast %156 : i32 to index
        %158 = vector.load %arg8[%c0_90, %c0_91, %157] : memref<1x8x1024xf32, #tpu.memory_space<vmem>>, vector<1x1x128xf32>
        %159 = vector.shape_cast %158 : vector<1x1x128xf32> to vector<1x128xf32>
        %c0_92 = arith.constant 0 : index
        %c1_93 = arith.constant 1 : index
        %160 = arith.index_cast %156 : i32 to index
        %161 = vector.load %arg8[%c0_92, %c1_93, %160] : memref<1x8x1024xf32, #tpu.memory_space<vmem>>, vector<1x1x128xf32>
        %162 = vector.shape_cast %161 : vector<1x1x128xf32> to vector<1x128xf32>
        %c0_94 = arith.constant 0 : index
        %c2_95 = arith.constant 2 : index
        %163 = arith.index_cast %156 : i32 to index
        %164 = vector.load %arg8[%c0_94, %c2_95, %163] : memref<1x8x1024xf32, #tpu.memory_space<vmem>>, vector<1x1x128xf32>
        %165 = vector.shape_cast %164 : vector<1x1x128xf32> to vector<1x128xf32>
        %c0_96 = arith.constant 0 : index
        %c3_97 = arith.constant 3 : index
        %166 = arith.index_cast %156 : i32 to index
        %167 = vector.load %arg8[%c0_96, %c3_97, %166] : memref<1x8x1024xf32, #tpu.memory_space<vmem>>, vector<1x1x128xf32>
        %168 = vector.shape_cast %167 : vector<1x1x128xf32> to vector<1x128xf32>
        %c0_98 = arith.constant 0 : index
        %c4_99 = arith.constant 4 : index
        %169 = arith.index_cast %156 : i32 to index
        %170 = vector.load %arg8[%c0_98, %c4_99, %169] : memref<1x8x1024xf32, #tpu.memory_space<vmem>>, vector<1x1x128xf32>
        %171 = vector.shape_cast %170 : vector<1x1x128xf32> to vector<1x128xf32>
        %c0_100 = arith.constant 0 : index
        %c5_101 = arith.constant 5 : index
        %172 = arith.index_cast %156 : i32 to index
        %173 = vector.load %arg8[%c0_100, %c5_101, %172] : memref<1x8x1024xf32, #tpu.memory_space<vmem>>, vector<1x1x128xf32>
        %174 = vector.shape_cast %173 : vector<1x1x128xf32> to vector<1x128xf32>
        %175 = vector.broadcast %arg12 : i32 to vector<1x128xi32>
        %176 = arith.cmpi slt, %175, %17 : vector<1x128xi32>
        %177 = arith.addf %arg13, %20 : vector<1x128xf32>
        %178 = arith.addf %arg14, %26 : vector<1x128xf32>
        %179 = arith.addf %arg15, %32 : vector<1x128xf32>
        %180 = arith.addf %arg16, %38 : vector<1x128xf32>
        %181 = arith.addf %arg17, %44 : vector<1x128xf32>
        %182 = arith.addf %arg18, %50 : vector<1x128xf32>
        %183 = arith.addf %arg19, %20 : vector<1x128xf32>
        %184 = arith.addf %arg20, %26 : vector<1x128xf32>
        %185 = arith.addf %arg21, %32 : vector<1x128xf32>
        %186 = arith.addf %arg22, %38 : vector<1x128xf32>
        %187 = arith.addf %arg23, %44 : vector<1x128xf32>
        %188 = arith.addf %arg24, %50 : vector<1x128xf32>
        %189 = arith.maximumf %177, %178 : vector<1x128xf32>
        %190 = arith.maximumf %179, %180 : vector<1x128xf32>
        %191 = arith.maximumf %181, %182 : vector<1x128xf32>
        %192 = arith.maximumf %189, %190 : vector<1x128xf32>
        %193 = arith.maximumf %192, %191 : vector<1x128xf32>
        %194 = arith.cmpf ogt, %184, %183 : vector<1x128xf32>
        %195 = arith.select %194, %184, %183 : vector<1x128xi1>, vector<1x128xf32>
        %196 = arith.select %194, %69, %68 : vector<1x128xi1>, vector<1x128xi32>
        %197 = arith.cmpf ogt, %186, %185 : vector<1x128xf32>
        %198 = arith.select %197, %186, %185 : vector<1x128xi1>, vector<1x128xf32>
        %199 = arith.select %197, %71, %70 : vector<1x128xi1>, vector<1x128xi32>
        %200 = arith.cmpf ogt, %188, %187 : vector<1x128xf32>
        %201 = arith.select %200, %188, %187 : vector<1x128xi1>, vector<1x128xf32>
        %202 = arith.select %200, %73, %72 : vector<1x128xi1>, vector<1x128xi32>
        %203 = arith.cmpf ogt, %198, %195 : vector<1x128xf32>
        %204 = arith.select %203, %198, %195 : vector<1x128xi1>, vector<1x128xf32>
        %205 = arith.select %203, %199, %196 : vector<1x128xi1>, vector<1x128xi32>
        %206 = arith.cmpf ogt, %201, %204 : vector<1x128xf32>
        %207 = arith.select %206, %201, %204 : vector<1x128xi1>, vector<1x128xf32>
        %208 = arith.select %206, %202, %205 : vector<1x128xi1>, vector<1x128xi32>
        %209 = arith.subf %177, %193 : vector<1x128xf32>
        %210 = math.exp %209 : vector<1x128xf32>
        %211 = arith.subf %178, %193 : vector<1x128xf32>
        %212 = math.exp %211 : vector<1x128xf32>
        %213 = arith.subf %179, %193 : vector<1x128xf32>
        %214 = math.exp %213 : vector<1x128xf32>
        %215 = arith.subf %180, %193 : vector<1x128xf32>
        %216 = math.exp %215 : vector<1x128xf32>
        %217 = arith.subf %181, %193 : vector<1x128xf32>
        %218 = math.exp %217 : vector<1x128xf32>
        %219 = arith.subf %182, %193 : vector<1x128xf32>
        %220 = math.exp %219 : vector<1x128xf32>
        %221 = arith.addf %210, %212 : vector<1x128xf32>
        %222 = arith.addf %214, %216 : vector<1x128xf32>
        %223 = arith.addf %218, %220 : vector<1x128xf32>
        %224 = arith.addf %221, %222 : vector<1x128xf32>
        %225 = arith.addf %224, %223 : vector<1x128xf32>
        %226 = math.log %225 : vector<1x128xf32>
        %227 = arith.addf %193, %226 : vector<1x128xf32>
        %228 = arith.addf %227, %159 : vector<1x128xf32>
        %229 = arith.addf %207, %159 : vector<1x128xf32>
        %230 = arith.select %176, %228, %arg13 : vector<1x128xi1>, vector<1x128xf32>
        %231 = arith.select %176, %229, %arg19 : vector<1x128xi1>, vector<1x128xf32>
        %c0_102 = arith.constant 0 : index
        %232 = arith.index_cast %156 : i32 to index
        %233 = vector.load %arg11[%c0_102, %232] : memref<8x1024xi32, #tpu.memory_space<vmem>>, vector<1x128xi32>
        tpu.vector_store %arg11[%c0_102, %232], %208 {strides = array<i32>} : memref<8x1024xi32, #tpu.memory_space<vmem>>, vector<1x128xi32>,
        %234 = arith.addf %arg13, %21 : vector<1x128xf32>
        %235 = arith.addf %arg14, %27 : vector<1x128xf32>
        %236 = arith.addf %arg15, %33 : vector<1x128xf32>
        %237 = arith.addf %arg16, %39 : vector<1x128xf32>
        %238 = arith.addf %arg17, %45 : vector<1x128xf32>
        %239 = arith.addf %arg18, %51 : vector<1x128xf32>
        %240 = arith.addf %arg19, %21 : vector<1x128xf32>
        %241 = arith.addf %arg20, %27 : vector<1x128xf32>
        %242 = arith.addf %arg21, %33 : vector<1x128xf32>
        %243 = arith.addf %arg22, %39 : vector<1x128xf32>
        %244 = arith.addf %arg23, %45 : vector<1x128xf32>
        %245 = arith.addf %arg24, %51 : vector<1x128xf32>
        %246 = arith.maximumf %234, %235 : vector<1x128xf32>
        %247 = arith.maximumf %236, %237 : vector<1x128xf32>
        %248 = arith.maximumf %238, %239 : vector<1x128xf32>
        %249 = arith.maximumf %246, %247 : vector<1x128xf32>
        %250 = arith.maximumf %249, %248 : vector<1x128xf32>
        %251 = arith.cmpf ogt, %241, %240 : vector<1x128xf32>
        %252 = arith.select %251, %241, %240 : vector<1x128xi1>, vector<1x128xf32>
        %253 = arith.select %251, %69, %68 : vector<1x128xi1>, vector<1x128xi32>
        %254 = arith.cmpf ogt, %243, %242 : vector<1x128xf32>
        %255 = arith.select %254, %243, %242 : vector<1x128xi1>, vector<1x128xf32>
        %256 = arith.select %254, %71, %70 : vector<1x128xi1>, vector<1x128xi32>
        %257 = arith.cmpf ogt, %245, %244 : vector<1x128xf32>
        %258 = arith.select %257, %245, %244 : vector<1x128xi1>, vector<1x128xf32>
        %259 = arith.select %257, %73, %72 : vector<1x128xi1>, vector<1x128xi32>
        %260 = arith.cmpf ogt, %255, %252 : vector<1x128xf32>
        %261 = arith.select %260, %255, %252 : vector<1x128xi1>, vector<1x128xf32>
        %262 = arith.select %260, %256, %253 : vector<1x128xi1>, vector<1x128xi32>
        %263 = arith.cmpf ogt, %258, %261 : vector<1x128xf32>
        %264 = arith.select %263, %258, %261 : vector<1x128xi1>, vector<1x128xf32>
        %265 = arith.select %263, %259, %262 : vector<1x128xi1>, vector<1x128xi32>
        %266 = arith.subf %234, %250 : vector<1x128xf32>
        %267 = math.exp %266 : vector<1x128xf32>
        %268 = arith.subf %235, %250 : vector<1x128xf32>
        %269 = math.exp %268 : vector<1x128xf32>
        %270 = arith.subf %236, %250 : vector<1x128xf32>
        %271 = math.exp %270 : vector<1x128xf32>
        %272 = arith.subf %237, %250 : vector<1x128xf32>
        %273 = math.exp %272 : vector<1x128xf32>
        %274 = arith.subf %238, %250 : vector<1x128xf32>
        %275 = math.exp %274 : vector<1x128xf32>
        %276 = arith.subf %239, %250 : vector<1x128xf32>
        %277 = math.exp %276 : vector<1x128xf32>
        %278 = arith.addf %267, %269 : vector<1x128xf32>
        %279 = arith.addf %271, %273 : vector<1x128xf32>
        %280 = arith.addf %275, %277 : vector<1x128xf32>
        %281 = arith.addf %278, %279 : vector<1x128xf32>
        %282 = arith.addf %281, %280 : vector<1x128xf32>
        %283 = math.log %282 : vector<1x128xf32>
        %284 = arith.addf %250, %283 : vector<1x128xf32>
        %285 = arith.addf %284, %162 : vector<1x128xf32>
        %286 = arith.addf %264, %162 : vector<1x128xf32>
        %287 = arith.select %176, %285, %arg14 : vector<1x128xi1>, vector<1x128xf32>
        %288 = arith.select %176, %286, %arg20 : vector<1x128xi1>, vector<1x128xf32>
        %c1_103 = arith.constant 1 : index
        %289 = arith.index_cast %156 : i32 to index
        %290 = vector.load %arg11[%c1_103, %289] : memref<8x1024xi32, #tpu.memory_space<vmem>>, vector<1x128xi32>
        tpu.vector_store %arg11[%c1_103, %289], %265 {strides = array<i32>} : memref<8x1024xi32, #tpu.memory_space<vmem>>, vector<1x128xi32>,
        %291 = arith.addf %arg13, %22 : vector<1x128xf32>
        %292 = arith.addf %arg14, %28 : vector<1x128xf32>
        %293 = arith.addf %arg15, %34 : vector<1x128xf32>
        %294 = arith.addf %arg16, %40 : vector<1x128xf32>
        %295 = arith.addf %arg17, %46 : vector<1x128xf32>
        %296 = arith.addf %arg18, %52 : vector<1x128xf32>
        %297 = arith.addf %arg19, %22 : vector<1x128xf32>
        %298 = arith.addf %arg20, %28 : vector<1x128xf32>
        %299 = arith.addf %arg21, %34 : vector<1x128xf32>
        %300 = arith.addf %arg22, %40 : vector<1x128xf32>
        %301 = arith.addf %arg23, %46 : vector<1x128xf32>
        %302 = arith.addf %arg24, %52 : vector<1x128xf32>
        %303 = arith.maximumf %291, %292 : vector<1x128xf32>
        %304 = arith.maximumf %293, %294 : vector<1x128xf32>
        %305 = arith.maximumf %295, %296 : vector<1x128xf32>
        %306 = arith.maximumf %303, %304 : vector<1x128xf32>
        %307 = arith.maximumf %306, %305 : vector<1x128xf32>
        %308 = arith.cmpf ogt, %298, %297 : vector<1x128xf32>
        %309 = arith.select %308, %298, %297 : vector<1x128xi1>, vector<1x128xf32>
        %310 = arith.select %308, %69, %68 : vector<1x128xi1>, vector<1x128xi32>
        %311 = arith.cmpf ogt, %300, %299 : vector<1x128xf32>
        %312 = arith.select %311, %300, %299 : vector<1x128xi1>, vector<1x128xf32>
        %313 = arith.select %311, %71, %70 : vector<1x128xi1>, vector<1x128xi32>
        %314 = arith.cmpf ogt, %302, %301 : vector<1x128xf32>
        %315 = arith.select %314, %302, %301 : vector<1x128xi1>, vector<1x128xf32>
        %316 = arith.select %314, %73, %72 : vector<1x128xi1>, vector<1x128xi32>
        %317 = arith.cmpf ogt, %312, %309 : vector<1x128xf32>
        %318 = arith.select %317, %312, %309 : vector<1x128xi1>, vector<1x128xf32>
        %319 = arith.select %317, %313, %310 : vector<1x128xi1>, vector<1x128xi32>
        %320 = arith.cmpf ogt, %315, %318 : vector<1x128xf32>
        %321 = arith.select %320, %315, %318 : vector<1x128xi1>, vector<1x128xf32>
        %322 = arith.select %320, %316, %319 : vector<1x128xi1>, vector<1x128xi32>
        %323 = arith.subf %291, %307 : vector<1x128xf32>
        %324 = math.exp %323 : vector<1x128xf32>
        %325 = arith.subf %292, %307 : vector<1x128xf32>
        %326 = math.exp %325 : vector<1x128xf32>
        %327 = arith.subf %293, %307 : vector<1x128xf32>
        %328 = math.exp %327 : vector<1x128xf32>
        %329 = arith.subf %294, %307 : vector<1x128xf32>
        %330 = math.exp %329 : vector<1x128xf32>
        %331 = arith.subf %295, %307 : vector<1x128xf32>
        %332 = math.exp %331 : vector<1x128xf32>
        %333 = arith.subf %296, %307 : vector<1x128xf32>
        %334 = math.exp %333 : vector<1x128xf32>
        %335 = arith.addf %324, %326 : vector<1x128xf32>
        %336 = arith.addf %328, %330 : vector<1x128xf32>
        %337 = arith.addf %332, %334 : vector<1x128xf32>
        %338 = arith.addf %335, %336 : vector<1x128xf32>
        %339 = arith.addf %338, %337 : vector<1x128xf32>
        %340 = math.log %339 : vector<1x128xf32>
        %341 = arith.addf %307, %340 : vector<1x128xf32>
        %342 = arith.addf %341, %165 : vector<1x128xf32>
        %343 = arith.addf %321, %165 : vector<1x128xf32>
        %344 = arith.select %176, %342, %arg15 : vector<1x128xi1>, vector<1x128xf32>
        %345 = arith.select %176, %343, %arg21 : vector<1x128xi1>, vector<1x128xf32>
        %c2_104 = arith.constant 2 : index
        %346 = arith.index_cast %156 : i32 to index
        %347 = vector.load %arg11[%c2_104, %346] : memref<8x1024xi32, #tpu.memory_space<vmem>>, vector<1x128xi32>
        tpu.vector_store %arg11[%c2_104, %346], %322 {strides = array<i32>} : memref<8x1024xi32, #tpu.memory_space<vmem>>, vector<1x128xi32>,
        %348 = arith.addf %arg13, %23 : vector<1x128xf32>
        %349 = arith.addf %arg14, %29 : vector<1x128xf32>
        %350 = arith.addf %arg15, %35 : vector<1x128xf32>
        %351 = arith.addf %arg16, %41 : vector<1x128xf32>
        %352 = arith.addf %arg17, %47 : vector<1x128xf32>
        %353 = arith.addf %arg18, %53 : vector<1x128xf32>
        %354 = arith.addf %arg19, %23 : vector<1x128xf32>
        %355 = arith.addf %arg20, %29 : vector<1x128xf32>
        %356 = arith.addf %arg21, %35 : vector<1x128xf32>
        %357 = arith.addf %arg22, %41 : vector<1x128xf32>
        %358 = arith.addf %arg23, %47 : vector<1x128xf32>
        %359 = arith.addf %arg24, %53 : vector<1x128xf32>
        %360 = arith.maximumf %348, %349 : vector<1x128xf32>
        %361 = arith.maximumf %350, %351 : vector<1x128xf32>
        %362 = arith.maximumf %352, %353 : vector<1x128xf32>
        %363 = arith.maximumf %360, %361 : vector<1x128xf32>
        %364 = arith.maximumf %363, %362 : vector<1x128xf32>
        %365 = arith.cmpf ogt, %355, %354 : vector<1x128xf32>
        %366 = arith.select %365, %355, %354 : vector<1x128xi1>, vector<1x128xf32>
        %367 = arith.select %365, %69, %68 : vector<1x128xi1>, vector<1x128xi32>
        %368 = arith.cmpf ogt, %357, %356 : vector<1x128xf32>
        %369 = arith.select %368, %357, %356 : vector<1x128xi1>, vector<1x128xf32>
        %370 = arith.select %368, %71, %70 : vector<1x128xi1>, vector<1x128xi32>
        %371 = arith.cmpf ogt, %359, %358 : vector<1x128xf32>
        %372 = arith.select %371, %359, %358 : vector<1x128xi1>, vector<1x128xf32>
        %373 = arith.select %371, %73, %72 : vector<1x128xi1>, vector<1x128xi32>
        %374 = arith.cmpf ogt, %369, %366 : vector<1x128xf32>
        %375 = arith.select %374, %369, %366 : vector<1x128xi1>, vector<1x128xf32>
        %376 = arith.select %374, %370, %367 : vector<1x128xi1>, vector<1x128xi32>
        %377 = arith.cmpf ogt, %372, %375 : vector<1x128xf32>
        %378 = arith.select %377, %372, %375 : vector<1x128xi1>, vector<1x128xf32>
        %379 = arith.select %377, %373, %376 : vector<1x128xi1>, vector<1x128xi32>
        %380 = arith.subf %348, %364 : vector<1x128xf32>
        %381 = math.exp %380 : vector<1x128xf32>
        %382 = arith.subf %349, %364 : vector<1x128xf32>
        %383 = math.exp %382 : vector<1x128xf32>
        %384 = arith.subf %350, %364 : vector<1x128xf32>
        %385 = math.exp %384 : vector<1x128xf32>
        %386 = arith.subf %351, %364 : vector<1x128xf32>
        %387 = math.exp %386 : vector<1x128xf32>
        %388 = arith.subf %352, %364 : vector<1x128xf32>
        %389 = math.exp %388 : vector<1x128xf32>
        %390 = arith.subf %353, %364 : vector<1x128xf32>
        %391 = math.exp %390 : vector<1x128xf32>
        %392 = arith.addf %381, %383 : vector<1x128xf32>
        %393 = arith.addf %385, %387 : vector<1x128xf32>
        %394 = arith.addf %389, %391 : vector<1x128xf32>
        %395 = arith.addf %392, %393 : vector<1x128xf32>
        %396 = arith.addf %395, %394 : vector<1x128xf32>
        %397 = math.log %396 : vector<1x128xf32>
        %398 = arith.addf %364, %397 : vector<1x128xf32>
        %399 = arith.addf %398, %168 : vector<1x128xf32>
        %400 = arith.addf %378, %168 : vector<1x128xf32>
        %401 = arith.select %176, %399, %arg16 : vector<1x128xi1>, vector<1x128xf32>
        %402 = arith.select %176, %400, %arg22 : vector<1x128xi1>, vector<1x128xf32>
        %c3_105 = arith.constant 3 : index
        %403 = arith.index_cast %156 : i32 to index
        %404 = vector.load %arg11[%c3_105, %403] : memref<8x1024xi32, #tpu.memory_space<vmem>>, vector<1x128xi32>
        tpu.vector_store %arg11[%c3_105, %403], %379 {strides = array<i32>} : memref<8x1024xi32, #tpu.memory_space<vmem>>, vector<1x128xi32>,
        %405 = arith.addf %arg13, %24 : vector<1x128xf32>
        %406 = arith.addf %arg14, %30 : vector<1x128xf32>
        %407 = arith.addf %arg15, %36 : vector<1x128xf32>
        %408 = arith.addf %arg16, %42 : vector<1x128xf32>
        %409 = arith.addf %arg17, %48 : vector<1x128xf32>
        %410 = arith.addf %arg18, %54 : vector<1x128xf32>
        %411 = arith.addf %arg19, %24 : vector<1x128xf32>
        %412 = arith.addf %arg20, %30 : vector<1x128xf32>
        %413 = arith.addf %arg21, %36 : vector<1x128xf32>
        %414 = arith.addf %arg22, %42 : vector<1x128xf32>
        %415 = arith.addf %arg23, %48 : vector<1x128xf32>
        %416 = arith.addf %arg24, %54 : vector<1x128xf32>
        %417 = arith.maximumf %405, %406 : vector<1x128xf32>
        %418 = arith.maximumf %407, %408 : vector<1x128xf32>
        %419 = arith.maximumf %409, %410 : vector<1x128xf32>
        %420 = arith.maximumf %417, %418 : vector<1x128xf32>
        %421 = arith.maximumf %420, %419 : vector<1x128xf32>
        %422 = arith.cmpf ogt, %412, %411 : vector<1x128xf32>
        %423 = arith.select %422, %412, %411 : vector<1x128xi1>, vector<1x128xf32>
        %424 = arith.select %422, %69, %68 : vector<1x128xi1>, vector<1x128xi32>
        %425 = arith.cmpf ogt, %414, %413 : vector<1x128xf32>
        %426 = arith.select %425, %414, %413 : vector<1x128xi1>, vector<1x128xf32>
        %427 = arith.select %425, %71, %70 : vector<1x128xi1>, vector<1x128xi32>
        %428 = arith.cmpf ogt, %416, %415 : vector<1x128xf32>
        %429 = arith.select %428, %416, %415 : vector<1x128xi1>, vector<1x128xf32>
        %430 = arith.select %428, %73, %72 : vector<1x128xi1>, vector<1x128xi32>
        %431 = arith.cmpf ogt, %426, %423 : vector<1x128xf32>
        %432 = arith.select %431, %426, %423 : vector<1x128xi1>, vector<1x128xf32>
        %433 = arith.select %431, %427, %424 : vector<1x128xi1>, vector<1x128xi32>
        %434 = arith.cmpf ogt, %429, %432 : vector<1x128xf32>
        %435 = arith.select %434, %429, %432 : vector<1x128xi1>, vector<1x128xf32>
        %436 = arith.select %434, %430, %433 : vector<1x128xi1>, vector<1x128xi32>
        %437 = arith.subf %405, %421 : vector<1x128xf32>
        %438 = math.exp %437 : vector<1x128xf32>
        %439 = arith.subf %406, %421 : vector<1x128xf32>
        %440 = math.exp %439 : vector<1x128xf32>
        %441 = arith.subf %407, %421 : vector<1x128xf32>
        %442 = math.exp %441 : vector<1x128xf32>
        %443 = arith.subf %408, %421 : vector<1x128xf32>
        %444 = math.exp %443 : vector<1x128xf32>
        %445 = arith.subf %409, %421 : vector<1x128xf32>
        %446 = math.exp %445 : vector<1x128xf32>
        %447 = arith.subf %410, %421 : vector<1x128xf32>
        %448 = math.exp %447 : vector<1x128xf32>
        %449 = arith.addf %438, %440 : vector<1x128xf32>
        %450 = arith.addf %442, %444 : vector<1x128xf32>
        %451 = arith.addf %446, %448 : vector<1x128xf32>
        %452 = arith.addf %449, %450 : vector<1x128xf32>
        %453 = arith.addf %452, %451 : vector<1x128xf32>
        %454 = math.log %453 : vector<1x128xf32>
        %455 = arith.addf %421, %454 : vector<1x128xf32>
        %456 = arith.addf %455, %171 : vector<1x128xf32>
        %457 = arith.addf %435, %171 : vector<1x128xf32>
        %458 = arith.select %176, %456, %arg17 : vector<1x128xi1>, vector<1x128xf32>
        %459 = arith.select %176, %457, %arg23 : vector<1x128xi1>, vector<1x128xf32>
        %c4_106 = arith.constant 4 : index
        %460 = arith.index_cast %156 : i32 to index
        %461 = vector.load %arg11[%c4_106, %460] : memref<8x1024xi32, #tpu.memory_space<vmem>>, vector<1x128xi32>
        tpu.vector_store %arg11[%c4_106, %460], %436 {strides = array<i32>} : memref<8x1024xi32, #tpu.memory_space<vmem>>, vector<1x128xi32>,
        %462 = arith.addf %arg13, %25 : vector<1x128xf32>
        %463 = arith.addf %arg14, %31 : vector<1x128xf32>
        %464 = arith.addf %arg15, %37 : vector<1x128xf32>
        %465 = arith.addf %arg16, %43 : vector<1x128xf32>
        %466 = arith.addf %arg17, %49 : vector<1x128xf32>
        %467 = arith.addf %arg18, %55 : vector<1x128xf32>
        %468 = arith.addf %arg19, %25 : vector<1x128xf32>
        %469 = arith.addf %arg20, %31 : vector<1x128xf32>
        %470 = arith.addf %arg21, %37 : vector<1x128xf32>
        %471 = arith.addf %arg22, %43 : vector<1x128xf32>
        %472 = arith.addf %arg23, %49 : vector<1x128xf32>
        %473 = arith.addf %arg24, %55 : vector<1x128xf32>
        %474 = arith.maximumf %462, %463 : vector<1x128xf32>
        %475 = arith.maximumf %464, %465 : vector<1x128xf32>
        %476 = arith.maximumf %466, %467 : vector<1x128xf32>
        %477 = arith.maximumf %474, %475 : vector<1x128xf32>
        %478 = arith.maximumf %477, %476 : vector<1x128xf32>
        %479 = arith.cmpf ogt, %469, %468 : vector<1x128xf32>
        %480 = arith.select %479, %469, %468 : vector<1x128xi1>, vector<1x128xf32>
        %481 = arith.select %479, %69, %68 : vector<1x128xi1>, vector<1x128xi32>
        %482 = arith.cmpf ogt, %471, %470 : vector<1x128xf32>
        %483 = arith.select %482, %471, %470 : vector<1x128xi1>, vector<1x128xf32>
        %484 = arith.select %482, %71, %70 : vector<1x128xi1>, vector<1x128xi32>
        %485 = arith.cmpf ogt, %473, %472 : vector<1x128xf32>
        %486 = arith.select %485, %473, %472 : vector<1x128xi1>, vector<1x128xf32>
        %487 = arith.select %485, %73, %72 : vector<1x128xi1>, vector<1x128xi32>
        %488 = arith.cmpf ogt, %483, %480 : vector<1x128xf32>
        %489 = arith.select %488, %483, %480 : vector<1x128xi1>, vector<1x128xf32>
        %490 = arith.select %488, %484, %481 : vector<1x128xi1>, vector<1x128xi32>
        %491 = arith.cmpf ogt, %486, %489 : vector<1x128xf32>
        %492 = arith.select %491, %486, %489 : vector<1x128xi1>, vector<1x128xf32>
        %493 = arith.select %491, %487, %490 : vector<1x128xi1>, vector<1x128xi32>
        %494 = arith.subf %462, %478 : vector<1x128xf32>
        %495 = math.exp %494 : vector<1x128xf32>
        %496 = arith.subf %463, %478 : vector<1x128xf32>
        %497 = math.exp %496 : vector<1x128xf32>
        %498 = arith.subf %464, %478 : vector<1x128xf32>
        %499 = math.exp %498 : vector<1x128xf32>
        %500 = arith.subf %465, %478 : vector<1x128xf32>
        %501 = math.exp %500 : vector<1x128xf32>
        %502 = arith.subf %466, %478 : vector<1x128xf32>
        %503 = math.exp %502 : vector<1x128xf32>
        %504 = arith.subf %467, %478 : vector<1x128xf32>
        %505 = math.exp %504 : vector<1x128xf32>
        %506 = arith.addf %495, %497 : vector<1x128xf32>
        %507 = arith.addf %499, %501 : vector<1x128xf32>
        %508 = arith.addf %503, %505 : vector<1x128xf32>
        %509 = arith.addf %506, %507 : vector<1x128xf32>
        %510 = arith.addf %509, %508 : vector<1x128xf32>
        %511 = math.log %510 : vector<1x128xf32>
        %512 = arith.addf %478, %511 : vector<1x128xf32>
        %513 = arith.addf %512, %174 : vector<1x128xf32>
        %514 = arith.addf %492, %174 : vector<1x128xf32>
        %515 = arith.select %176, %513, %arg18 : vector<1x128xi1>, vector<1x128xf32>
        %516 = arith.select %176, %514, %arg24 : vector<1x128xi1>, vector<1x128xf32>
        %c5_107 = arith.constant 5 : index
        %517 = arith.index_cast %156 : i32 to index
        %518 = vector.load %arg11[%c5_107, %517] : memref<8x1024xi32, #tpu.memory_space<vmem>>, vector<1x128xi32>
        tpu.vector_store %arg11[%c5_107, %517], %493 {strides = array<i32>} : memref<8x1024xi32, #tpu.memory_space<vmem>>, vector<1x128xi32>,
        scf.yield %230, %287, %344, %401, %458, %515, %231, %288, %345, %402, %459, %516 : vector<1x128xf32>, vector<1x128xf32>, vector<1x128xf32>, vector<1x128xf32>, vector<1x128xf32>, vector<1x128xf32>, vector<1x128xf32>, vector<1x128xf32>, vector<1x128xf32>, vector<1x128xf32>, vector<1x128xf32>, vector<1x128xf32>
      }
      %95 = arith.addf %94#0, %62 : vector<1x128xf32>
      %96 = arith.addf %94#1, %63 : vector<1x128xf32>
      %97 = arith.addf %94#2, %64 : vector<1x128xf32>
      %98 = arith.addf %94#3, %65 : vector<1x128xf32>
      %99 = arith.addf %94#4, %66 : vector<1x128xf32>
      %100 = arith.addf %94#5, %67 : vector<1x128xf32>
      %101 = arith.maximumf %95, %96 : vector<1x128xf32>
      %102 = arith.maximumf %97, %98 : vector<1x128xf32>
      %103 = arith.maximumf %99, %100 : vector<1x128xf32>
      %104 = arith.maximumf %101, %102 : vector<1x128xf32>
      %105 = arith.maximumf %104, %103 : vector<1x128xf32>
      %106 = arith.subf %95, %105 : vector<1x128xf32>
      %107 = math.exp %106 : vector<1x128xf32>
      %108 = arith.subf %96, %105 : vector<1x128xf32>
      %109 = math.exp %108 : vector<1x128xf32>
      %110 = arith.subf %97, %105 : vector<1x128xf32>
      %111 = math.exp %110 : vector<1x128xf32>
      %112 = arith.subf %98, %105 : vector<1x128xf32>
      %113 = math.exp %112 : vector<1x128xf32>
      %114 = arith.subf %99, %105 : vector<1x128xf32>
      %115 = math.exp %114 : vector<1x128xf32>
      %116 = arith.subf %100, %105 : vector<1x128xf32>
      %117 = math.exp %116 : vector<1x128xf32>
      %118 = arith.addf %107, %109 : vector<1x128xf32>
      %119 = arith.addf %111, %113 : vector<1x128xf32>
      %120 = arith.addf %115, %117 : vector<1x128xf32>
      %121 = arith.addf %118, %119 : vector<1x128xf32>
      %122 = arith.addf %121, %120 : vector<1x128xf32>
      %123 = math.log %122 : vector<1x128xf32>
      %124 = arith.addf %105, %123 : vector<1x128xf32>
      %c0_81 = arith.constant 0 : index
      %c0_82 = arith.constant 0 : index
      %c0_83 = arith.constant 0 : index
      %125 = vector.load %arg9[%c0_81, %c0_82, %c0_83] : memref<1x1x128xf32, #tpu.memory_space<vmem>>, vector<1x1x128xf32>
      %126 = vector.shape_cast %125 : vector<1x1x128xf32> to vector<1x128xf32>
      %127 = vector.shape_cast %124 : vector<1x128xf32> to vector<1x1x128xf32>
      tpu.vector_store %arg9[%c0_81, %c0_82, %c0_83], %127 {strides = array<i32>} : memref<1x1x128xf32, #tpu.memory_space<vmem>>, vector<1x1x128xf32>,
      %128 = arith.addf %94#6, %62 : vector<1x128xf32>
      %129 = arith.addf %94#7, %63 : vector<1x128xf32>
      %130 = arith.addf %94#8, %64 : vector<1x128xf32>
      %131 = arith.addf %94#9, %65 : vector<1x128xf32>
      %132 = arith.addf %94#10, %66 : vector<1x128xf32>
      %133 = arith.addf %94#11, %67 : vector<1x128xf32>
      %134 = arith.cmpf ogt, %129, %128 : vector<1x128xf32>
      %135 = arith.select %134, %129, %128 : vector<1x128xi1>, vector<1x128xf32>
      %136 = arith.select %134, %69, %68 : vector<1x128xi1>, vector<1x128xi32>
      %137 = arith.cmpf ogt, %131, %130 : vector<1x128xf32>
      %138 = arith.select %137, %131, %130 : vector<1x128xi1>, vector<1x128xf32>
      %139 = arith.select %137, %71, %70 : vector<1x128xi1>, vector<1x128xi32>
      %140 = arith.cmpf ogt, %133, %132 : vector<1x128xf32>
      %141 = arith.select %140, %133, %132 : vector<1x128xi1>, vector<1x128xf32>
      %142 = arith.select %140, %73, %72 : vector<1x128xi1>, vector<1x128xi32>
      %143 = arith.cmpf ogt, %138, %135 : vector<1x128xf32>
      %144 = arith.select %143, %138, %135 : vector<1x128xi1>, vector<1x128xf32>
      %145 = arith.select %143, %139, %136 : vector<1x128xi1>, vector<1x128xi32>
      %146 = arith.cmpf ogt, %141, %144 : vector<1x128xf32>
      %147 = arith.select %146, %142, %145 : vector<1x128xi1>, vector<1x128xi32>
      %c0_i32_84 = arith.constant 0 : i32
      %148 = vector.broadcast %c0_i32_84 : i32 to vector<1x1024xi32>
      %c0_85 = arith.constant 0 : index
      %c0_86 = arith.constant 0 : index
      %c0_87 = arith.constant 0 : index
      %149 = vector.load %arg10[%c0_85, %c0_86, %c0_87] : memref<1x1x1024xi32, #tpu.memory_space<vmem>>, vector<1x1x1024xi32>
      %150 = vector.shape_cast %149 : vector<1x1x1024xi32> to vector<1x1024xi32>
      %151 = vector.shape_cast %148 : vector<1x1024xi32> to vector<1x1x1024xi32>
      tpu.vector_store %arg10[%c0_85, %c0_86, %c0_87], %151 {strides = array<i32>} : memref<1x1x1024xi32, #tpu.memory_space<vmem>>, vector<1x1x1024xi32>,
      %c0_i32_88 = arith.constant 0 : i32
      %152 = arith.subi %19, %c0_i32_88 : i32
      %153 = arith.addi %c0_i32_88, %152 : i32
      %c1_i32_89 = arith.constant 1 : i32
      %154 = scf.for %arg12 = %c0_i32_88 to %153 step %c1_i32_89 iter_args(%arg13 = %147) -> (vector<1x128xi32>)  : i32 {
        %c1_i32_90 = arith.constant 1 : i32
        %155 = arith.subi %19, %c1_i32_90 : i32
        %156 = arith.subi %155, %arg12 : i32
        %c128_i32 = arith.constant 128 : i32
        %157 = arith.muli %156, %c128_i32 : i32
        %158 = tpu.assume_multiple %157, 128 : i32
        %159 = vector.broadcast %156 : i32 to vector<1x128xi32>
        %160 = arith.cmpi slt, %159, %17 : vector<1x128xi32>
        %c1_i32_91 = arith.constant 1 : i32
        %161 = vector.broadcast %c1_i32_91 : i32 to vector<1x128xi32>
        %162 = arith.subi %17, %161 : vector<1x128xi32>
        %163 = vector.broadcast %156 : i32 to vector<1x128xi32>
        %164 = arith.cmpi eq, %163, %162 : vector<1x128xi32>
        %165 = arith.select %164, %147, %arg13 : vector<1x128xi1>, vector<1x128xi32>
        %c0_i32_92 = arith.constant 0 : i32
        %166 = vector.broadcast %c0_i32_92 : i32 to vector<1x128xi32>
        %167 = arith.select %160, %165, %166 : vector<1x128xi1>, vector<1x128xi32>
        %c0_93 = arith.constant 0 : index
        %c0_94 = arith.constant 0 : index
        %168 = arith.index_cast %158 : i32 to index
        %169 = vector.load %arg10[%c0_93, %c0_94, %168] : memref<1x1x1024xi32, #tpu.memory_space<vmem>>, vector<1x1x128xi32>
        %170 = vector.shape_cast %169 : vector<1x1x128xi32> to vector<1x128xi32>
        %171 = vector.shape_cast %167 : vector<1x128xi32> to vector<1x1x128xi32>
        tpu.vector_store %arg10[%c0_93, %c0_94, %168], %171 {strides = array<i32>} : memref<1x1x1024xi32, #tpu.memory_space<vmem>>, vector<1x1x128xi32>,
        %c0_95 = arith.constant 0 : index
        %172 = arith.index_cast %158 : i32 to index
        %173 = vector.load %arg11[%c0_95, %172] : memref<8x1024xi32, #tpu.memory_space<vmem>>, vector<1x128xi32>
        %c1_i32_96 = arith.constant 1 : i32
        %174 = vector.broadcast %c1_i32_96 : i32 to vector<1x128xi32>
        %175 = arith.cmpi eq, %165, %174 : vector<1x128xi32>
        %c1_97 = arith.constant 1 : index
        %176 = arith.index_cast %158 : i32 to index
        %177 = vector.load %arg11[%c1_97, %176] : memref<8x1024xi32, #tpu.memory_space<vmem>>, vector<1x128xi32>
        %178 = arith.select %175, %177, %173 : vector<1x128xi1>, vector<1x128xi32>
        %c2_i32_98 = arith.constant 2 : i32
        %179 = vector.broadcast %c2_i32_98 : i32 to vector<1x128xi32>
        %180 = arith.cmpi eq, %165, %179 : vector<1x128xi32>
        %c2_99 = arith.constant 2 : index
        %181 = arith.index_cast %158 : i32 to index
        %182 = vector.load %arg11[%c2_99, %181] : memref<8x1024xi32, #tpu.memory_space<vmem>>, vector<1x128xi32>
        %183 = arith.select %180, %182, %178 : vector<1x128xi1>, vector<1x128xi32>
        %c3_i32_100 = arith.constant 3 : i32
        %184 = vector.broadcast %c3_i32_100 : i32 to vector<1x128xi32>
        %185 = arith.cmpi eq, %165, %184 : vector<1x128xi32>
        %c3_101 = arith.constant 3 : index
        %186 = arith.index_cast %158 : i32 to index
        %187 = vector.load %arg11[%c3_101, %186] : memref<8x1024xi32, #tpu.memory_space<vmem>>, vector<1x128xi32>
        %188 = arith.select %185, %187, %183 : vector<1x128xi1>, vector<1x128xi32>
        %c4_i32_102 = arith.constant 4 : i32
        %189 = vector.broadcast %c4_i32_102 : i32 to vector<1x128xi32>
        %190 = arith.cmpi eq, %165, %189 : vector<1x128xi32>
        %c4_103 = arith.constant 4 : index
        %191 = arith.index_cast %158 : i32 to index
        %192 = vector.load %arg11[%c4_103, %191] : memref<8x1024xi32, #tpu.memory_space<vmem>>, vector<1x128xi32>
        %193 = arith.select %190, %192, %188 : vector<1x128xi1>, vector<1x128xi32>
        %c5_i32_104 = arith.constant 5 : i32
        %194 = vector.broadcast %c5_i32_104 : i32 to vector<1x128xi32>
        %195 = arith.cmpi eq, %165, %194 : vector<1x128xi32>
        %c5_105 = arith.constant 5 : index
        %196 = arith.index_cast %158 : i32 to index
        %197 = vector.load %arg11[%c5_105, %196] : memref<8x1024xi32, #tpu.memory_space<vmem>>, vector<1x128xi32>
        %198 = arith.select %195, %197, %193 : vector<1x128xi1>, vector<1x128xi32>
        %c1_i32_106 = arith.constant 1 : i32
        %199 = arith.cmpi sge, %156, %c1_i32_106 : i32
        %200 = vector.broadcast %199 : i1 to vector<1x128xi1>
        %201 = arith.andi %160, %200 : vector<1x128xi1>
        %202 = arith.select %201, %198, %165 : vector<1x128xi1>, vector<1x128xi32>
        scf.yield %202 : vector<1x128xi32>
      }
    } else {
    }
    return
  }
  func.func @transform_0(%arg0: i32, %arg1: i32, %arg2: memref<1xi32, #tpu.memory_space<smem>>) -> (i32, i32) {
    %c1_i32 = arith.constant 1 : i32
    %0 = arith.muli %arg0, %c1_i32 : i32
    %1 = arith.addi %0, %arg1 : i32
    %c0_i32 = arith.constant 0 : i32
    %c0_i32_0 = arith.constant 0 : i32
    return %c0_i32, %1 : i32, i32
  }
  func.func @transform_1(%arg0: i32, %arg1: i32, %arg2: memref<1xi32, #tpu.memory_space<smem>>) -> (i32, i32) {
    %c0_i32 = arith.constant 0 : i32
    %c0_i32_0 = arith.constant 0 : i32
    %c0_i32_1 = arith.constant 0 : i32
    return %c0_i32, %c0_i32_0 : i32, i32
  }
  func.func @transform_2(%arg0: i32, %arg1: i32, %arg2: memref<1xi32, #tpu.memory_space<smem>>) -> (i32, i32) {
    %c0_i32 = arith.constant 0 : i32
    %c0_i32_0 = arith.constant 0 : i32
    %c0_i32_1 = arith.constant 0 : i32
    return %c0_i32, %c0_i32_0 : i32, i32
  }
  func.func @transform_3(%arg0: i32, %arg1: i32, %arg2: memref<1xi32, #tpu.memory_space<smem>>) -> (i32, i32, i32) {
    %c0_i32 = arith.constant 0 : i32
    %c0_i32_0 = arith.constant 0 : i32
    %c0_i32_1 = arith.constant 0 : i32
    return %arg0, %c0_i32, %c0_i32_0 : i32, i32, i32
  }
  func.func @transform_4(%arg0: i32, %arg1: i32, %arg2: memref<1xi32, #tpu.memory_space<smem>>) -> (i32, i32) {
    %c0_i32 = arith.constant 0 : i32
    %c0_i32_0 = arith.constant 0 : i32
    %c0_i32_1 = arith.constant 0 : i32
    return %c0_i32, %c0_i32_0 : i32, i32
  }
  func.func @transform_5(%arg0: i32, %arg1: i32, %arg2: memref<1xi32, #tpu.memory_space<smem>>) -> (i32, i32, i32) {
    %c0_i32 = arith.constant 0 : i32
    %c0_i32_0 = arith.constant 0 : i32
    %c0_i32_1 = arith.constant 0 : i32
    return %arg0, %c0_i32, %c0_i32_0 : i32, i32, i32
  }
  func.func @transform_6(%arg0: i32, %arg1: i32, %arg2: memref<1xi32, #tpu.memory_space<smem>>) -> (i32, i32, i32) {
    %c0_i32 = arith.constant 0 : i32
    %c0_i32_0 = arith.constant 0 : i32
    %c0_i32_1 = arith.constant 0 : i32
    return %arg0, %c0_i32, %c0_i32_0 : i32, i32, i32
  }
  func.func @transform_7(%arg0: i32, %arg1: i32, %arg2: memref<1xi32, #tpu.memory_space<smem>>) -> (i32, i32, i32) {
    %c0_i32 = arith.constant 0 : i32
    %c0_i32_0 = arith.constant 0 : i32
    %c0_i32_1 = arith.constant 0 : i32
    return %arg0, %c0_i32, %c0_i32_0 : i32, i32, i32
  }
}

</mosaic_0001>

<llo_original>
// kernel: tpu_custom_call.1
$region0: #{tpu_custom_call.1}
  #allocation0 [shape = 'u32[]', space=smem, size = 0x4, offset = 0x4, fixed_abs, tag = 'smem constant byte address 0x4 - core index']
  #allocation1 [shape = 'u32[72,128]{1,0:T(1,128)}', space=vmem, size = 0x9000, scoped, tag = 'internal scratch']
  #allocation2 [shape = 's32[8,1024]{1,0:T(8,128)}', space=vmem, size = 0x8000, scoped, tag = 'scratch operand']
  #allocation3 [shape = 's32[1]{0}', space=sflag, size = 0x4, scoped, tag = 'scoped memory for tpu_custom_call.1']
  #allocation4 [shape = 's32[1]{0:T(128)S(6)}', space=smem, size = 0x200, scoped, tag = 'prefetched SMEM operand 0']
  %s0 = inlined_call_operand.<no memory space> [shape: s32[1], index: 0, kind: input, shape index: {}]
  %s1 = inlined_call_operand.hbm [shape: bf16[32,1024], index: 1, kind: input, shape index: {}]
  %s2 = inlined_call_operand.vmem [shape: bf16[8,32], index: 2, kind: input, shape index: {}]
  %s3 = inlined_call_operand.vmem [shape: f32[8,1], index: 3, kind: input, shape index: {}]
  %s4 = inlined_call_operand.vmem [shape: s32[1,1,128], index: 4, kind: input, shape index: {}]
  %s5 = inlined_call_operand.hbm [shape: f32[48,128], index: 5, kind: input, shape index: {}]
  %s6 = inlined_call_operand.hbm [shape: f32[1,8,1024], index: 6, kind: output, shape index: {0}]
  %s7 = inlined_call_operand.hbm [shape: f32[1,1,128], index: 7, kind: output, shape index: {1}]
  %s8 = inlined_call_operand.hbm [shape: s32[1,1,1024], index: 8, kind: output, shape index: {2}]
  %9 = xla_tuple %s6, %s7, %s8
  %s10 = sld [smem:[#allocation0]]
  $region72: #{tpu_custom_call.1} parent=0
    _
  %s12 = ssub.s32 1, %s10
  %s13 = scalar_select 0, %s12, %s10
  %14 = sst [smem:[#allocation4]] %s0
  $region1: #{tpu_custom_call.1} parent=0
    #allocation5 [shape = 'u8[65536]{0}', space=vmem, size = 0x10000, scoped, tag = 'input window, operand 1, single buffered']
    #allocation6 [shape = 's32[1]{0}', space=sflag, size = 0x4, scoped, tag = 'scoped memory for tpu_custom_call.1']
    #allocation7 [shape = 's32[1]{0}', space=sflag, size = 0x4, scoped, tag = 'scoped memory for tpu_custom_call.1']
    #allocation8 [shape = 'u8[24576]{0}', space=vmem, size = 0x6000, scoped, tag = 'input window, operand 5, single buffered']
    #allocation9 [shape = 's32[1]{0}', space=sflag, size = 0x4, scoped, tag = 'scoped memory for tpu_custom_call.1']
    #allocation10 [shape = 'u8[32768]{0}', space=vmem, size = 0x8000, scoped, tag = 'output window, operand 0, single buffered']
    #allocation11 [shape = 'u8[512]{0}', space=vmem, size = 0x400, scoped, tag = 'output window, operand 1, single buffered']
    #allocation12 [shape = 's32[1]{0}', space=sflag, size = 0x4, scoped, tag = 'scoped memory for tpu_custom_call.1']
    #allocation13 [shape = 'u8[4096]{0}', space=vmem, size = 0x1000, scoped, tag = 'output window, operand 2, single buffered']
    %15 = vsyncpa [#allocation6], 0
    %16 = vsyncpa [#allocation9], 0
    %17 = vsyncpa [#allocation7], 0
    %18 = vsyncpa [#allocation12], 0
    // Predicated region
    $region2: #{tpu_custom_call.1} parent=1 // pred_check
      _
    $region3: #{tpu_custom_call.1} parent=1 // pred_check_branch
      %20 = sbr.rel (0) target = $region5
    $region4: #{tpu_custom_call.1} parent=1 // pred_region
      %s21 = sadd.s32 0, 0
      %s22 = smul.u32 8, %s21
      %24 = vsyncadd [#allocation6], 0
      %s25 = smul.addr %s22, 4
      %s26 = scalar_lea.hbm %s1, %s25
      %s27 = sshll.u32 %s26, 4
      %s28 = int_to_ptr.hbm [resolvable:$true] %s27
      %s29 = sshll.u32 [#allocation5], 4
      %s30 = int_to_ptr.vmem [resolvable:$true] %s29
      %35 = dma.hbm_to_vmem [thread:$0]  %s28, 2048, %s30, [#allocation6], 512, 512, 32
    $region5: #{tpu_custom_call.1} parent=1 // pred_fallthru
      _
    // Predicated region
    $region6: #{tpu_custom_call.1} parent=1 // pred_check
      _
    $region7: #{tpu_custom_call.1} parent=1 // pred_check_branch
      %37 = sbr.rel (0) target = $region9
    $region8: #{tpu_custom_call.1} parent=1 // pred_region
      _
    $region9: #{tpu_custom_call.1} parent=1 // pred_fallthru
      _
    // Predicated region
    $region10: #{tpu_custom_call.1} parent=1 // pred_check
      _
    $region11: #{tpu_custom_call.1} parent=1 // pred_check_branch
      %39 = sbr.rel (0) target = $region13
    $region12: #{tpu_custom_call.1} parent=1 // pred_region
      _
    $region13: #{tpu_custom_call.1} parent=1 // pred_fallthru
      _
    // Predicated region
    $region14: #{tpu_custom_call.1} parent=1 // pred_check
      _
    $region15: #{tpu_custom_call.1} parent=1 // pred_check_branch
      %41 = sbr.rel (0) target = $region17
    $region16: #{tpu_custom_call.1} parent=1 // pred_region
      _
    $region17: #{tpu_custom_call.1} parent=1 // pred_fallthru
      _
    // Predicated region
    $region18: #{tpu_custom_call.1} parent=1 // pred_check
      _
    $region19: #{tpu_custom_call.1} parent=1 // pred_check_branch
      %43 = sbr.rel (0) target = $region21
    $region20: #{tpu_custom_call.1} parent=1 // pred_region
      %45 = vsyncadd [#allocation9], 0
      %s46 = sshll.u32 %s5, 4
      %s47 = int_to_ptr.hbm [resolvable:$true] %s46
      %s48 = sshll.u32 [#allocation8], 4
      %s49 = int_to_ptr.vmem [resolvable:$true] %s48
      %54 = dma.hbm_to_vmem [thread:$0]  %s47, 768, %s49, [#allocation9], 128, 128, 8
    $region21: #{tpu_custom_call.1} parent=1 // pred_fallthru
      _
    // Predicated region
    $region22: #{tpu_custom_call.1} parent=1 // pred_check
      _
    $region23: #{tpu_custom_call.1} parent=1 // pred_check_branch
      %56 = sbr.rel (0) target = $region25
    $region24: #{tpu_custom_call.1} parent=1 // pred_region
      %58 = dma.done [#allocation6], 2048
    $region25: #{tpu_custom_call.1} parent=1 // pred_fallthru
      _
    // Predicated region
    $region26: #{tpu_custom_call.1} parent=1 // pred_check
      _
    $region27: #{tpu_custom_call.1} parent=1 // pred_check_branch
      %60 = sbr.rel (0) target = $region29
    $region28: #{tpu_custom_call.1} parent=1 // pred_region
      %62 = dma.done [#allocation9], 768
    $region29: #{tpu_custom_call.1} parent=1 // pred_fallthru
      _
    %s63 = sadd.s32 0, 0
    %s64 = smul.u32 8, %s63
    %v66 = vld [vmem:[%s2] sm:$0xf]
    %v67 = vld [vmem:[#allocation5] sm:$0xff]
    %v68 = vld [vmem:[#allocation5 + $0x8] sm:$0xff]
    %v69 = vld [vmem:[#allocation5 + $0x10] sm:$0xff]
    %v70 = vld [vmem:[#allocation5 + $0x18] sm:$0xff]
    %v71 = vld [vmem:[#allocation5 + $0x20] sm:$0xff]
    %v72 = vld [vmem:[#allocation5 + $0x28] sm:$0xff]
    %v73 = vld [vmem:[#allocation5 + $0x30] sm:$0xff]
    %v74 = vld [vmem:[#allocation5 + $0x38] sm:$0xff]
    %v75 = vld [vmem:[#allocation5 + $0x40] sm:$0xff]
    %v76 = vld [vmem:[#allocation5 + $0x48] sm:$0xff]
    %v77 = vld [vmem:[#allocation5 + $0x50] sm:$0xff]
    %v78 = vld [vmem:[#allocation5 + $0x58] sm:$0xff]
    %v79 = vld [vmem:[#allocation5 + $0x60] sm:$0xff]
    %v80 = vld [vmem:[#allocation5 + $0x68] sm:$0xff]
    %v81 = vld [vmem:[#allocation5 + $0x70] sm:$0xff]
    %v82 = vld [vmem:[#allocation5 + $0x78] sm:$0xff]
    %v83 = vld [vmem:[%s3] sm:$0xff]
    %85 = vset.pattern.permute.xlu0 0
    %86 = vperm.xlu0 %85, %v83
    %v87 = vpop.permute.xlu0 %86
    %v105 = vunpack.c.l.b16 %v67
    %v106 = vunpack.c.h.b16 %v67
    %v107 = vunpack.c.l.b16 %v68
    %v108 = vunpack.c.h.b16 %v68
    %v109 = vunpack.c.l.b16 %v69
    %v110 = vunpack.c.h.b16 %v69
    %v111 = vunpack.c.l.b16 %v70
    %v112 = vunpack.c.h.b16 %v70
    %v113 = vunpack.c.l.b16 %v71
    %v114 = vunpack.c.h.b16 %v71
    %v115 = vunpack.c.l.b16 %v72
    %v116 = vunpack.c.h.b16 %v72
    %v117 = vunpack.c.l.b16 %v73
    %v118 = vunpack.c.h.b16 %v73
    %v119 = vunpack.c.l.b16 %v74
    %v120 = vunpack.c.h.b16 %v74
    %v121 = vunpack.c.l.b16 %v75
    %v122 = vunpack.c.h.b16 %v75
    %v123 = vunpack.c.l.b16 %v76
    %v124 = vunpack.c.h.b16 %v76
    %v125 = vunpack.c.l.b16 %v77
    %v126 = vunpack.c.h.b16 %v77
    %v127 = vunpack.c.l.b16 %v78
    %v128 = vunpack.c.h.b16 %v78
    %v129 = vunpack.c.l.b16 %v79
    %v130 = vunpack.c.h.b16 %v79
    %v131 = vunpack.c.l.b16 %v80
    %v132 = vunpack.c.h.b16 %v80
    %v133 = vunpack.c.l.b16 %v81
    %v134 = vunpack.c.h.b16 %v81
    %v135 = vunpack.c.l.b16 %v82
    %v136 = vunpack.c.h.b16 %v82
    %v137 = vpack.c.b16 %v113, %v105
    %v138 = vpack.c.b16 %v114, %v106
    %v139 = vpack.c.b16 %v115, %v107
    %v140 = vpack.c.b16 %v116, %v108
    %v141 = vpack.c.b16 %v117, %v109
    %v142 = vpack.c.b16 %v118, %v110
    %v143 = vpack.c.b16 %v119, %v111
    %v144 = vpack.c.b16 %v120, %v112
    %v145 = vpack.c.b16 %v129, %v121
    %v146 = vpack.c.b16 %v130, %v122
    %v147 = vpack.c.b16 %v131, %v123
    %v148 = vpack.c.b16 %v132, %v124
    %v149 = vpack.c.b16 %v133, %v125
    %v150 = vpack.c.b16 %v134, %v126
    %v151 = vpack.c.b16 %v135, %v127
    %v152 = vpack.c.b16 %v136, %v128
    %vm169 = vcmask 261120
    %v171 = vsel %vm169, %v66, 0
    %173 = vmatpush.bf16.msra.mxu0 0
    %174 = vmatpush.bf16.msra.mxu0 0
    %175 = vmatpush.bf16.msra.mxu0 0
    %176 = vmatpush.bf16.msra.mxu0 0
    %177 = vmatpush.bf16.msra.mxu0 0
    %178 = vmatpush.bf16.msra.mxu0 0
    %179 = vmatpush.bf16.msra.mxu0 %v145
    %180 = vmatpush.bf16.msra.mxu0 %v137
    %181 = vmatmul.bf16.gmra.mxu0 %v171
    %v182 = vpop.f32.mrf.mxu0
    %v183 = vadd.f32 %v87, %v182
    %v184 = vpop.f32.mrf.mxu0
    %185 = vdwg.mxu0
    %186 = vmatpush.bf16.msra.mxu0 0
    %187 = vmatpush.bf16.msra.mxu0 0
    %188 = vmatpush.bf16.msra.mxu0 0
    %189 = vmatpush.bf16.msra.mxu0 0
    %190 = vmatpush.bf16.msra.mxu0 0
    %191 = vmatpush.bf16.msra.mxu0 0
    %192 = vmatpush.bf16.msra.mxu0 %v146
    %193 = vmatpush.bf16.msra.mxu0 %v138
    %194 = vmatmul.bf16.gmra.mxu0 %v171
    %v195 = vpop.f32.mrf.mxu0
    %v196 = vadd.f32 %v87, %v195
    %v197 = vpop.f32.mrf.mxu0
    %198 = vdwg.mxu0
    %199 = vmatpush.bf16.msra.mxu0 0
    %200 = vmatpush.bf16.msra.mxu0 0
    %201 = vmatpush.bf16.msra.mxu0 0
    %202 = vmatpush.bf16.msra.mxu0 0
    %203 = vmatpush.bf16.msra.mxu0 0
    %204 = vmatpush.bf16.msra.mxu0 0
    %205 = vmatpush.bf16.msra.mxu0 %v147
    %206 = vmatpush.bf16.msra.mxu0 %v139
    %207 = vmatmul.bf16.gmra.mxu0 %v171
    %v208 = vpop.f32.mrf.mxu0
    %v209 = vadd.f32 %v87, %v208
    %v210 = vpop.f32.mrf.mxu0
    %211 = vdwg.mxu0
    %212 = vmatpush.bf16.msra.mxu0 0
    %213 = vmatpush.bf16.msra.mxu0 0
    %214 = vmatpush.bf16.msra.mxu0 0
    %215 = vmatpush.bf16.msra.mxu0 0
    %216 = vmatpush.bf16.msra.mxu0 0
    %217 = vmatpush.bf16.msra.mxu0 0
    %218 = vmatpush.bf16.msra.mxu0 %v148
    %219 = vmatpush.bf16.msra.mxu0 %v140
    %220 = vmatmul.bf16.gmra.mxu0 %v171
    %v221 = vpop.f32.mrf.mxu0
    %v222 = vadd.f32 %v87, %v221
    %v223 = vpop.f32.mrf.mxu0
    %224 = vdwg.mxu0
    %225 = vmatpush.bf16.msra.mxu0 0
    %226 = vmatpush.bf16.msra.mxu0 0
    %227 = vmatpush.bf16.msra.mxu0 0
    %228 = vmatpush.bf16.msra.mxu0 0
    %229 = vmatpush.bf16.msra.mxu0 0
    %230 = vmatpush.bf16.msra.mxu0 0
    %231 = vmatpush.bf16.msra.mxu0 %v149
    %232 = vmatpush.bf16.msra.mxu0 %v141
    %233 = vmatmul.bf16.gmra.mxu0 %v171
    %v234 = vpop.f32.mrf.mxu0
    %v235 = vadd.f32 %v87, %v234
    %v236 = vpop.f32.mrf.mxu0
    %237 = vdwg.mxu0
    %238 = vmatpush.bf16.msra.mxu0 0
    %239 = vmatpush.bf16.msra.mxu0 0
    %240 = vmatpush.bf16.msra.mxu0 0
    %241 = vmatpush.bf16.msra.mxu0 0
    %242 = vmatpush.bf16.msra.mxu0 0
    %243 = vmatpush.bf16.msra.mxu0 0
    %244 = vmatpush.bf16.msra.mxu0 %v150
    %245 = vmatpush.bf16.msra.mxu0 %v142
    %246 = vmatmul.bf16.gmra.mxu0 %v171
    %v247 = vpop.f32.mrf.mxu0
    %v248 = vadd.f32 %v87, %v247
    %v249 = vpop.f32.mrf.mxu0
    %250 = vdwg.mxu0
    %251 = vmatpush.bf16.msra.mxu0 0
    %252 = vmatpush.bf16.msra.mxu0 0
    %253 = vmatpush.bf16.msra.mxu0 0
    %254 = vmatpush.bf16.msra.mxu0 0
    %255 = vmatpush.bf16.msra.mxu0 0
    %256 = vmatpush.bf16.msra.mxu0 0
    %257 = vmatpush.bf16.msra.mxu0 %v151
    %258 = vmatpush.bf16.msra.mxu0 %v143
    %259 = vmatmul.bf16.gmra.mxu0 %v171
    %v260 = vpop.f32.mrf.mxu0
    %v261 = vadd.f32 %v87, %v260
    %v262 = vpop.f32.mrf.mxu0
    %263 = vdwg.mxu0
    %264 = vmatpush.bf16.msra.mxu0 0
    %265 = vmatpush.bf16.msra.mxu0 0
    %266 = vmatpush.bf16.msra.mxu0 0
    %267 = vmatpush.bf16.msra.mxu0 0
    %268 = vmatpush.bf16.msra.mxu0 0
    %269 = vmatpush.bf16.msra.mxu0 0
    %270 = vmatpush.bf16.msra.mxu0 %v152
    %271 = vmatpush.bf16.msra.mxu0 %v144
    %272 = vmatmul.bf16.gmra.mxu0 %v171
    %v273 = vpop.f32.mrf.mxu0
    %v274 = vadd.f32 %v87, %v273
    %v275 = vpop.f32.mrf.mxu0
    %276 = vdwg.mxu0
    %s277 = smul.u32 0, 1024
    %s278 = sshra.s32 %s277, 7
    %s279 = sand.u32 %s277, 127
    %s280 = smul.addr %s278, 8
    %s281 = scalar_lea.vmem [#allocation10], %s280
    %282 = vst [vmem:[%s281] sm:$0xff] %v183
    %283 = vst [vmem:[%s281 + $0x8] sm:$0xff] %v196
    %284 = vst [vmem:[%s281 + $0x10] sm:$0xff] %v209
    %285 = vst [vmem:[%s281 + $0x18] sm:$0xff] %v222
    %286 = vst [vmem:[%s281 + $0x20] sm:$0xff] %v235
    %287 = vst [vmem:[%s281 + $0x28] sm:$0xff] %v248
    %288 = vst [vmem:[%s281 + $0x30] sm:$0xff] %v261
    %289 = vst [vmem:[%s281 + $0x38] sm:$0xff] %v274
    %p290 = scmp.eq.s32.totalorder 0, 0
    // Predicated region
    $region30: #{tpu_custom_call.1} parent=1 // pred_check
      %p291 = pneg %p290
    $region31: #{tpu_custom_call.1} parent=1 // pred_check_branch
      %293 = sbr.rel (%p291) target = $region33
    $region32: #{tpu_custom_call.1} parent=1 // pred_region
      %v294 = vld [vmem:[%s4] sm:$0x1]
      %s295 = sld [smem:[#allocation4]]
      %v296 = vld [vmem:[#allocation8] sm:$0x1]
      %v297 = vld [vmem:[#allocation8 + $0x1] sm:$0x1]
      %v298 = vld [vmem:[#allocation8 + $0x2] sm:$0x1]
      %v299 = vld [vmem:[#allocation8 + $0x3] sm:$0x1]
      %v300 = vld [vmem:[#allocation8 + $0x4] sm:$0x1]
      %v301 = vld [vmem:[#allocation8 + $0x5] sm:$0x1]
      %v302 = vld [vmem:[#allocation8 + $0x6] sm:$0x1]
      %v303 = vld [vmem:[#allocation8 + $0x7] sm:$0x1]
      %v304 = vld [vmem:[#allocation8 + $0x8] sm:$0x1]
      %v305 = vld [vmem:[#allocation8 + $0x9] sm:$0x1]
      %v306 = vld [vmem:[#allocation8 + $0xa] sm:$0x1]
      %v307 = vld [vmem:[#allocation8 + $0xb] sm:$0x1]
      %v308 = vld [vmem:[#allocation8 + $0xc] sm:$0x1]
      %v309 = vld [vmem:[#allocation8 + $0xd] sm:$0x1]
      %v310 = vld [vmem:[#allocation8 + $0xe] sm:$0x1]
      %v311 = vld [vmem:[#allocation8 + $0xf] sm:$0x1]
      %v312 = vld [vmem:[#allocation8 + $0x10] sm:$0x1]
      %v313 = vld [vmem:[#allocation8 + $0x11] sm:$0x1]
      %v314 = vld [vmem:[#allocation8 + $0x12] sm:$0x1]
      %v315 = vld [vmem:[#allocation8 + $0x13] sm:$0x1]
      %v316 = vld [vmem:[#allocation8 + $0x14] sm:$0x1]
      %v317 = vld [vmem:[#allocation8 + $0x15] sm:$0x1]
      %v318 = vld [vmem:[#allocation8 + $0x16] sm:$0x1]
      %v319 = vld [vmem:[#allocation8 + $0x17] sm:$0x1]
      %v320 = vld [vmem:[#allocation8 + $0x18] sm:$0x1]
      %v321 = vld [vmem:[#allocation8 + $0x19] sm:$0x1]
      %v322 = vld [vmem:[#allocation8 + $0x1a] sm:$0x1]
      %v323 = vld [vmem:[#allocation8 + $0x1b] sm:$0x1]
      %v324 = vld [vmem:[#allocation8 + $0x1c] sm:$0x1]
      %v325 = vld [vmem:[#allocation8 + $0x1d] sm:$0x1]
      %v326 = vld [vmem:[#allocation8 + $0x1e] sm:$0x1]
      %v327 = vld [vmem:[#allocation8 + $0x1f] sm:$0x1]
      %v328 = vld [vmem:[#allocation8 + $0x20] sm:$0x1]
      %v329 = vld [vmem:[#allocation8 + $0x21] sm:$0x1]
      %v330 = vld [vmem:[#allocation8 + $0x22] sm:$0x1]
      %v331 = vld [vmem:[#allocation8 + $0x23] sm:$0x1]
      %v332 = vld [vmem:[#allocation8 + $0x24] sm:$0x1]
      %v333 = vld [vmem:[#allocation8 + $0x25] sm:$0x1]
      %v334 = vld [vmem:[#allocation8 + $0x26] sm:$0x1]
      %v335 = vld [vmem:[#allocation8 + $0x27] sm:$0x1]
      %v336 = vld [vmem:[#allocation8 + $0x28] sm:$0x1]
      %v337 = vld [vmem:[#allocation8 + $0x29] sm:$0x1]
      %v338 = vld [vmem:[#allocation8 + $0x2a] sm:$0x1]
      %v339 = vld [vmem:[#allocation8 + $0x2b] sm:$0x1]
      %v340 = vld [vmem:[#allocation8 + $0x2c] sm:$0x1]
      %v341 = vld [vmem:[#allocation8 + $0x2d] sm:$0x1]
      %v342 = vld [vmem:[#allocation8 + $0x2e] sm:$0x1]
      %v343 = vld [vmem:[#allocation8 + $0x2f] sm:$0x1]
      %v344 = vld [vmem:[#allocation10] ss:$0 sm:$0xff]
      %v345 = vadd.f32 %v344, %v332
      %v346 = vld [vmem:[#allocation10 + $0x1] ss:$0 sm:$0xff]
      %v347 = vadd.f32 %v346, %v333
      %v348 = vld [vmem:[#allocation10 + $0x2] ss:$0 sm:$0xff]
      %v349 = vadd.f32 %v348, %v334
      %v350 = vld [vmem:[#allocation10 + $0x3] ss:$0 sm:$0xff]
      %v351 = vadd.f32 %v350, %v335
      %v352 = vld [vmem:[#allocation10 + $0x4] ss:$0 sm:$0xff]
      %v353 = vadd.f32 %v352, %v336
      %v354 = vld [vmem:[#allocation10 + $0x5] ss:$0 sm:$0xff]
      %v355 = vadd.f32 %v354, %v337
      // While loop
      $region34: #{tpu_custom_call.1} parent=32 // loop_pre_header
        _
      $region35: #{tpu_custom_call.1} parent=32 // loop_header
        %s357 = sphi 1, %s359
        %p358 = scmp.ge.s32.totalorder %s357, %s295
        %v362 = vphi %v345, %v447
        %v363 = vphi %v347, %v512
        %v364 = vphi %v349, %v575
        %v365 = vphi %v351, %v638
        %v366 = vphi %v353, %v701
        %v367 = vphi %v355, %v764
        %v368 = vphi %v345, %v448
        %v369 = vphi %v347, %v513
        %v370 = vphi %v349, %v576
        %v371 = vphi %v351, %v639
        %v372 = vphi %v353, %v702
        %v373 = vphi %v355, %v765
      $region36: #{tpu_custom_call.1} parent=32 // loop_header_branch
        %361 = sbr.rel (%p358) target = $region40
      $region37: #{tpu_custom_call.1} parent=32 // loop_body
        %s374 = smul.u32 %s357, 128
        %s375 = sshra.s32 %s374, 7
        %s376 = sand.u32 %s374, 127
        %s377 = smul.addr %s375, 8
        %s378 = scalar_lea.vmem [#allocation10], %s377
        %v379 = vld [vmem:[%s378] ss:$0 sm:$0xff]
        %v380 = vld [vmem:[%s378 + $0x1] ss:$0 sm:$0xff]
        %v381 = vld [vmem:[%s378 + $0x2] ss:$0 sm:$0xff]
        %v382 = vld [vmem:[%s378 + $0x3] ss:$0 sm:$0xff]
        %v383 = vld [vmem:[%s378 + $0x4] ss:$0 sm:$0xff]
        %v384 = vld [vmem:[%s378 + $0x5] ss:$0 sm:$0xff]
        %v385 = vstv %s357
        %vm386 = vcmp.lt.s32.totalorder %v385, %v294
        %v387 = vadd.f32 %v362, %v296
        %v388 = vadd.f32 %v363, %v302
        %v389 = vadd.f32 %v364, %v308
        %v390 = vadd.f32 %v365, %v314
        %v391 = vadd.f32 %v366, %v320
        %v392 = vadd.f32 %v367, %v326
        %v393 = vadd.f32 %v368, %v296
        %v394 = vadd.f32 %v369, %v302
        %v395 = vadd.f32 %v370, %v308
        %v396 = vadd.f32 %v371, %v314
        %v397 = vadd.f32 %v372, %v320
        %v398 = vadd.f32 %v373, %v326
        %v399 = vmax.f32 %v387, %v388
        %v400 = vmax.f32 %v389, %v390
        %v401 = vmax.f32 %v391, %v392
        %v402 = vmax.f32 %v399, %v400
        %v403 = vmax.f32 %v402, %v401
        %vm404 = vcmp.gt.f32.partialorder %v394, %v393
        %v405 = vsel %vm404, %v394, %v393
        %v406 = vsel %vm404, 1, 0
        %vm407 = vcmp.gt.f32.partialorder %v396, %v395
        %v408 = vsel %vm407, %v396, %v395
        %v409 = vsel %vm407, 3, 2
        %vm410 = vcmp.gt.f32.partialorder %v398, %v397
        %v411 = vsel %vm410, %v398, %v397
        %v412 = vsel %vm410, 5, 4
        %vm413 = vcmp.gt.f32.partialorder %v408, %v405
        %v414 = vsel %vm413, %v408, %v405
        %v415 = vsel %vm413, %v409, %v406
        %vm416 = vcmp.gt.f32.partialorder %v411, %v414
        %v417 = vsel %vm416, %v411, %v414
        %v418 = vsel %vm416, %v412, %v415
        %v419 = vsub.f32 %v387, %v403
        %v420 = vmul.f32 %v419, 1.442695
        %v421 = vpow.pop %v420
        %v422 = vsub.f32 %v388, %v403
        %v423 = vmul.f32 %v422, 1.442695
        %v424 = vpow.pop %v423
        %v425 = vsub.f32 %v389, %v403
        %v426 = vmul.f32 %v425, 1.442695
        %v427 = vpow.pop %v426
        %v428 = vsub.f32 %v390, %v403
        %v429 = vmul.f32 %v428, 1.442695
        %v430 = vpow.pop %v429
        %v431 = vsub.f32 %v391, %v403
        %v432 = vmul.f32 %v431, 1.442695
        %v433 = vpow.pop %v432
        %v434 = vsub.f32 %v392, %v403
        %v435 = vmul.f32 %v434, 1.442695
        %v436 = vpow.pop %v435
        %v437 = vadd.f32 %v421, %v424
        %v438 = vadd.f32 %v427, %v430
        %v439 = vadd.f32 %v433, %v436
        %v440 = vadd.f32 %v437, %v438
        %v441 = vadd.f32 %v440, %v439
        %v442 = vlog2.pop %v441
        %v443 = vmul.f32 %v442, 0.6931472
        %v444 = vadd.f32 %v403, %v443
        %v445 = vadd.f32 %v444, %v379
        %v446 = vadd.f32 %v417, %v379
        %v447 = vsel %vm386, %v445, %v362
        %v448 = vsel %vm386, %v446, %v368
        %s449 = smul.addr %s375, 8
        %s450 = scalar_lea.vmem [#allocation2], %s449
        %451 = vst [vmem:[%s450] sm:$0x1] %v418
        %v452 = vadd.f32 %v362, %v297
        %v453 = vadd.f32 %v363, %v303
        %v454 = vadd.f32 %v364, %v309
        %v455 = vadd.f32 %v365, %v315
        %v456 = vadd.f32 %v366, %v321
        %v457 = vadd.f32 %v367, %v327
        %v458 = vadd.f32 %v368, %v297
        %v459 = vadd.f32 %v369, %v303
        %v460 = vadd.f32 %v370, %v309
        %v461 = vadd.f32 %v371, %v315
        %v462 = vadd.f32 %v372, %v321
        %v463 = vadd.f32 %v373, %v327
        %v464 = vmax.f32 %v452, %v453
        %v465 = vmax.f32 %v454, %v455
        %v466 = vmax.f32 %v456, %v457
        %v467 = vmax.f32 %v464, %v465
        %v468 = vmax.f32 %v467, %v466
        %vm469 = vcmp.gt.f32.partialorder %v459, %v458
        %v470 = vsel %vm469, %v459, %v458
        %v471 = vsel %vm469, 1, 0
        %vm472 = vcmp.gt.f32.partialorder %v461, %v460
        %v473 = vsel %vm472, %v461, %v460
        %v474 = vsel %vm472, 3, 2
        %vm475 = vcmp.gt.f32.partialorder %v463, %v462
        %v476 = vsel %vm475, %v463, %v462
        %v477 = vsel %vm475, 5, 4
        %vm478 = vcmp.gt.f32.partialorder %v473, %v470
        %v479 = vsel %vm478, %v473, %v470
        %v480 = vsel %vm478, %v474, %v471
        %vm481 = vcmp.gt.f32.partialorder %v476, %v479
        %v482 = vsel %vm481, %v476, %v479
        %v483 = vsel %vm481, %v477, %v480
        %v484 = vsub.f32 %v452, %v468
        %v485 = vmul.f32 %v484, 1.442695
        %v486 = vpow.pop %v485
        %v487 = vsub.f32 %v453, %v468
        %v488 = vmul.f32 %v487, 1.442695
        %v489 = vpow.pop %v488
        %v490 = vsub.f32 %v454, %v468
        %v491 = vmul.f32 %v490, 1.442695
        %v492 = vpow.pop %v491
        %v493 = vsub.f32 %v455, %v468
        %v494 = vmul.f32 %v493, 1.442695
        %v495 = vpow.pop %v494
        %v496 = vsub.f32 %v456, %v468
        %v497 = vmul.f32 %v496, 1.442695
        %v498 = vpow.pop %v497
        %v499 = vsub.f32 %v457, %v468
        %v500 = vmul.f32 %v499, 1.442695
        %v501 = vpow.pop %v500
        %v502 = vadd.f32 %v486, %v489
        %v503 = vadd.f32 %v492, %v495
        %v504 = vadd.f32 %v498, %v501
        %v505 = vadd.f32 %v502, %v503
        %v506 = vadd.f32 %v505, %v504
        %v507 = vlog2.pop %v506
        %v508 = vmul.f32 %v507, 0.6931472
        %v509 = vadd.f32 %v468, %v508
        %v510 = vadd.f32 %v509, %v380
        %v511 = vadd.f32 %v482, %v380
        %v512 = vsel %vm386, %v510, %v363
        %v513 = vsel %vm386, %v511, %v369
        %514 = vst [vmem:[%s450 + $0x1] sm:$0x1] %v483
        %v515 = vadd.f32 %v362, %v298
        %v516 = vadd.f32 %v363, %v304
        %v517 = vadd.f32 %v364, %v310
        %v518 = vadd.f32 %v365, %v316
        %v519 = vadd.f32 %v366, %v322
        %v520 = vadd.f32 %v367, %v328
        %v521 = vadd.f32 %v368, %v298
        %v522 = vadd.f32 %v369, %v304
        %v523 = vadd.f32 %v370, %v310
        %v524 = vadd.f32 %v371, %v316
        %v525 = vadd.f32 %v372, %v322
        %v526 = vadd.f32 %v373, %v328
        %v527 = vmax.f32 %v515, %v516
        %v528 = vmax.f32 %v517, %v518
        %v529 = vmax.f32 %v519, %v520
        %v530 = vmax.f32 %v527, %v528
        %v531 = vmax.f32 %v530, %v529
        %vm532 = vcmp.gt.f32.partialorder %v522, %v521
        %v533 = vsel %vm532, %v522, %v521
        %v534 = vsel %vm532, 1, 0
        %vm535 = vcmp.gt.f32.partialorder %v524, %v523
        %v536 = vsel %vm535, %v524, %v523
        %v537 = vsel %vm535, 3, 2
        %vm538 = vcmp.gt.f32.partialorder %v526, %v525
        %v539 = vsel %vm538, %v526, %v525
        %v540 = vsel %vm538, 5, 4
        %vm541 = vcmp.gt.f32.partialorder %v536, %v533
        %v542 = vsel %vm541, %v536, %v533
        %v543 = vsel %vm541, %v537, %v534
        %vm544 = vcmp.gt.f32.partialorder %v539, %v542
        %v545 = vsel %vm544, %v539, %v542
        %v546 = vsel %vm544, %v540, %v543
        %v547 = vsub.f32 %v515, %v531
        %v548 = vmul.f32 %v547, 1.442695
        %v549 = vpow.pop %v548
        %v550 = vsub.f32 %v516, %v531
        %v551 = vmul.f32 %v550, 1.442695
        %v552 = vpow.pop %v551
        %v553 = vsub.f32 %v517, %v531
        %v554 = vmul.f32 %v553, 1.442695
        %v555 = vpow.pop %v554
        %v556 = vsub.f32 %v518, %v531
        %v557 = vmul.f32 %v556, 1.442695
        %v558 = vpow.pop %v557
        %v559 = vsub.f32 %v519, %v531
        %v560 = vmul.f32 %v559, 1.442695
        %v561 = vpow.pop %v560
        %v562 = vsub.f32 %v520, %v531
        %v563 = vmul.f32 %v562, 1.442695
        %v564 = vpow.pop %v563
        %v565 = vadd.f32 %v549, %v552
        %v566 = vadd.f32 %v555, %v558
        %v567 = vadd.f32 %v561, %v564
        %v568 = vadd.f32 %v565, %v566
        %v569 = vadd.f32 %v568, %v567
        %v570 = vlog2.pop %v569
        %v571 = vmul.f32 %v570, 0.6931472
        %v572 = vadd.f32 %v531, %v571
        %v573 = vadd.f32 %v572, %v381
        %v574 = vadd.f32 %v545, %v381
        %v575 = vsel %vm386, %v573, %v364
        %v576 = vsel %vm386, %v574, %v370
        %577 = vst [vmem:[%s450 + $0x2] sm:$0x1] %v546
        %v578 = vadd.f32 %v362, %v299
        %v579 = vadd.f32 %v363, %v305
        %v580 = vadd.f32 %v364, %v311
        %v581 = vadd.f32 %v365, %v317
        %v582 = vadd.f32 %v366, %v323
        %v583 = vadd.f32 %v367, %v329
        %v584 = vadd.f32 %v368, %v299
        %v585 = vadd.f32 %v369, %v305
        %v586 = vadd.f32 %v370, %v311
        %v587 = vadd.f32 %v371, %v317
        %v588 = vadd.f32 %v372, %v323
        %v589 = vadd.f32 %v373, %v329
        %v590 = vmax.f32 %v578, %v579
        %v591 = vmax.f32 %v580, %v581
        %v592 = vmax.f32 %v582, %v583
        %v593 = vmax.f32 %v590, %v591
        %v594 = vmax.f32 %v593, %v592
        %vm595 = vcmp.gt.f32.partialorder %v585, %v584
        %v596 = vsel %vm595, %v585, %v584
        %v597 = vsel %vm595, 1, 0
        %vm598 = vcmp.gt.f32.partialorder %v587, %v586
        %v599 = vsel %vm598, %v587, %v586
        %v600 = vsel %vm598, 3, 2
        %vm601 = vcmp.gt.f32.partialorder %v589, %v588
        %v602 = vsel %vm601, %v589, %v588
        %v603 = vsel %vm601, 5, 4
        %vm604 = vcmp.gt.f32.partialorder %v599, %v596
        %v605 = vsel %vm604, %v599, %v596
        %v606 = vsel %vm604, %v600, %v597
        %vm607 = vcmp.gt.f32.partialorder %v602, %v605
        %v608 = vsel %vm607, %v602, %v605
        %v609 = vsel %vm607, %v603, %v606
        %v610 = vsub.f32 %v578, %v594
        %v611 = vmul.f32 %v610, 1.442695
        %v612 = vpow.pop %v611
        %v613 = vsub.f32 %v579, %v594
        %v614 = vmul.f32 %v613, 1.442695
        %v615 = vpow.pop %v614
        %v616 = vsub.f32 %v580, %v594
        %v617 = vmul.f32 %v616, 1.442695
        %v618 = vpow.pop %v617
        %v619 = vsub.f32 %v581, %v594
        %v620 = vmul.f32 %v619, 1.442695
        %v621 = vpow.pop %v620
        %v622 = vsub.f32 %v582, %v594
        %v623 = vmul.f32 %v622, 1.442695
        %v624 = vpow.pop %v623
        %v625 = vsub.f32 %v583, %v594
        %v626 = vmul.f32 %v625, 1.442695
        %v627 = vpow.pop %v626
        %v628 = vadd.f32 %v612, %v615
        %v629 = vadd.f32 %v618, %v621
        %v630 = vadd.f32 %v624, %v627
        %v631 = vadd.f32 %v628, %v629
        %v632 = vadd.f32 %v631, %v630
        %v633 = vlog2.pop %v632
        %v634 = vmul.f32 %v633, 0.6931472
        %v635 = vadd.f32 %v594, %v634
        %v636 = vadd.f32 %v635, %v382
        %v637 = vadd.f32 %v608, %v382
        %v638 = vsel %vm386, %v636, %v365
        %v639 = vsel %vm386, %v637, %v371
        %640 = vst [vmem:[%s450 + $0x3] sm:$0x1] %v609
        %v641 = vadd.f32 %v362, %v300
        %v642 = vadd.f32 %v363, %v306
        %v643 = vadd.f32 %v364, %v312
        %v644 = vadd.f32 %v365, %v318
        %v645 = vadd.f32 %v366, %v324
        %v646 = vadd.f32 %v367, %v330
        %v647 = vadd.f32 %v368, %v300
        %v648 = vadd.f32 %v369, %v306
        %v649 = vadd.f32 %v370, %v312
        %v650 = vadd.f32 %v371, %v318
        %v651 = vadd.f32 %v372, %v324
        %v652 = vadd.f32 %v373, %v330
        %v653 = vmax.f32 %v641, %v642
        %v654 = vmax.f32 %v643, %v644
        %v655 = vmax.f32 %v645, %v646
        %v656 = vmax.f32 %v653, %v654
        %v657 = vmax.f32 %v656, %v655
        %vm658 = vcmp.gt.f32.partialorder %v648, %v647
        %v659 = vsel %vm658, %v648, %v647
        %v660 = vsel %vm658, 1, 0
        %vm661 = vcmp.gt.f32.partialorder %v650, %v649
        %v662 = vsel %vm661, %v650, %v649
        %v663 = vsel %vm661, 3, 2
        %vm664 = vcmp.gt.f32.partialorder %v652, %v651
        %v665 = vsel %vm664, %v652, %v651
        %v666 = vsel %vm664, 5, 4
        %vm667 = vcmp.gt.f32.partialorder %v662, %v659
        %v668 = vsel %vm667, %v662, %v659
        %v669 = vsel %vm667, %v663, %v660
        %vm670 = vcmp.gt.f32.partialorder %v665, %v668
        %v671 = vsel %vm670, %v665, %v668
        %v672 = vsel %vm670, %v666, %v669
        %v673 = vsub.f32 %v641, %v657
        %v674 = vmul.f32 %v673, 1.442695
        %v675 = vpow.pop %v674
        %v676 = vsub.f32 %v642, %v657
        %v677 = vmul.f32 %v676, 1.442695
        %v678 = vpow.pop %v677
        %v679 = vsub.f32 %v643, %v657
        %v680 = vmul.f32 %v679, 1.442695
        %v681 = vpow.pop %v680
        %v682 = vsub.f32 %v644, %v657
        %v683 = vmul.f32 %v682, 1.442695
        %v684 = vpow.pop %v683
        %v685 = vsub.f32 %v645, %v657
        %v686 = vmul.f32 %v685, 1.442695
        %v687 = vpow.pop %v686
        %v688 = vsub.f32 %v646, %v657
        %v689 = vmul.f32 %v688, 1.442695
        %v690 = vpow.pop %v689
        %v691 = vadd.f32 %v675, %v678
        %v692 = vadd.f32 %v681, %v684
        %v693 = vadd.f32 %v687, %v690
        %v694 = vadd.f32 %v691, %v692
        %v695 = vadd.f32 %v694, %v693
        %v696 = vlog2.pop %v695
        %v697 = vmul.f32 %v696, 0.6931472
        %v698 = vadd.f32 %v657, %v697
        %v699 = vadd.f32 %v698, %v383
        %v700 = vadd.f32 %v671, %v383
        %v701 = vsel %vm386, %v699, %v366
        %v702 = vsel %vm386, %v700, %v372
        %703 = vst [vmem:[%s450 + $0x4] sm:$0x1] %v672
        %v704 = vadd.f32 %v362, %v301
        %v705 = vadd.f32 %v363, %v307
        %v706 = vadd.f32 %v364, %v313
        %v707 = vadd.f32 %v365, %v319
        %v708 = vadd.f32 %v366, %v325
        %v709 = vadd.f32 %v367, %v331
        %v710 = vadd.f32 %v368, %v301
        %v711 = vadd.f32 %v369, %v307
        %v712 = vadd.f32 %v370, %v313
        %v713 = vadd.f32 %v371, %v319
        %v714 = vadd.f32 %v372, %v325
        %v715 = vadd.f32 %v373, %v331
        %v716 = vmax.f32 %v704, %v705
        %v717 = vmax.f32 %v706, %v707
        %v718 = vmax.f32 %v708, %v709
        %v719 = vmax.f32 %v716, %v717
        %v720 = vmax.f32 %v719, %v718
        %vm721 = vcmp.gt.f32.partialorder %v711, %v710
        %v722 = vsel %vm721, %v711, %v710
        %v723 = vsel %vm721, 1, 0
        %vm724 = vcmp.gt.f32.partialorder %v713, %v712
        %v725 = vsel %vm724, %v713, %v712
        %v726 = vsel %vm724, 3, 2
        %vm727 = vcmp.gt.f32.partialorder %v715, %v714
        %v728 = vsel %vm727, %v715, %v714
        %v729 = vsel %vm727, 5, 4
        %vm730 = vcmp.gt.f32.partialorder %v725, %v722
        %v731 = vsel %vm730, %v725, %v722
        %v732 = vsel %vm730, %v726, %v723
        %vm733 = vcmp.gt.f32.partialorder %v728, %v731
        %v734 = vsel %vm733, %v728, %v731
        %v735 = vsel %vm733, %v729, %v732
        %v736 = vsub.f32 %v704, %v720
        %v737 = vmul.f32 %v736, 1.442695
        %v738 = vpow.pop %v737
        %v739 = vsub.f32 %v705, %v720
        %v740 = vmul.f32 %v739, 1.442695
        %v741 = vpow.pop %v740
        %v742 = vsub.f32 %v706, %v720
        %v743 = vmul.f32 %v742, 1.442695
        %v744 = vpow.pop %v743
        %v745 = vsub.f32 %v707, %v720
        %v746 = vmul.f32 %v745, 1.442695
        %v747 = vpow.pop %v746
        %v748 = vsub.f32 %v708, %v720
        %v749 = vmul.f32 %v748, 1.442695
        %v750 = vpow.pop %v749
        %v751 = vsub.f32 %v709, %v720
        %v752 = vmul.f32 %v751, 1.442695
        %v753 = vpow.pop %v752
        %v754 = vadd.f32 %v738, %v741
        %v755 = vadd.f32 %v744, %v747
        %v756 = vadd.f32 %v750, %v753
        %v757 = vadd.f32 %v754, %v755
        %v758 = vadd.f32 %v757, %v756
        %v759 = vlog2.pop %v758
        %v760 = vmul.f32 %v759, 0.6931472
        %v761 = vadd.f32 %v720, %v760
        %v762 = vadd.f32 %v761, %v384
        %v763 = vadd.f32 %v734, %v384
        %v764 = vsel %vm386, %v762, %v367
        %v765 = vsel %vm386, %v763, %v373
        %766 = vst [vmem:[%s450 + $0x5] sm:$0x1] %v735
      $region38: #{tpu_custom_call.1} parent=32 // loop_footer
        %s359 = sadd.s32 %s357, 1
      $region39: #{tpu_custom_call.1} parent=32 // loop_footer_branch
        %356 = sbr.rel target = $region35
      $region40: #{tpu_custom_call.1} parent=32 // loop_exit
        _
      %v767 = vadd.f32 %v362, %v338
      %v768 = vadd.f32 %v363, %v339
      %v769 = vadd.f32 %v364, %v340
      %v770 = vadd.f32 %v365, %v341
      %v771 = vadd.f32 %v366, %v342
      %v772 = vadd.f32 %v367, %v343
      %v773 = vmax.f32 %v767, %v768
      %v774 = vmax.f32 %v769, %v770
      %v775 = vmax.f32 %v771, %v772
      %v776 = vmax.f32 %v773, %v774
      %v777 = vmax.f32 %v776, %v775
      %v778 = vsub.f32 %v767, %v777
      %v779 = vmul.f32 %v778, 1.442695
      %v780 = vpow.pop %v779
      %v781 = vsub.f32 %v768, %v777
      %v782 = vmul.f32 %v781, 1.442695
      %v783 = vpow.pop %v782
      %v784 = vsub.f32 %v769, %v777
      %v785 = vmul.f32 %v784, 1.442695
      %v786 = vpow.pop %v785
      %v787 = vsub.f32 %v770, %v777
      %v788 = vmul.f32 %v787, 1.442695
      %v789 = vpow.pop %v788
      %v790 = vsub.f32 %v771, %v777
      %v791 = vmul.f32 %v790, 1.442695
      %v792 = vpow.pop %v791
      %v793 = vsub.f32 %v772, %v777
      %v794 = vmul.f32 %v793, 1.442695
      %v795 = vpow.pop %v794
      %v796 = vadd.f32 %v780, %v783
      %v797 = vadd.f32 %v786, %v789
      %v798 = vadd.f32 %v792, %v795
      %v799 = vadd.f32 %v796, %v797
      %v800 = vadd.f32 %v799, %v798
      %v801 = vlog2.pop %v800
      %v802 = vmul.f32 %v801, 0.6931472
      %v803 = vadd.f32 %v777, %v802
      %804 = vst [vmem:[#allocation11] sm:$0x1] %v803
      %v805 = vadd.f32 %v368, %v338
      %v806 = vadd.f32 %v369, %v339
      %v807 = vadd.f32 %v370, %v340
      %v808 = vadd.f32 %v371, %v341
      %v809 = vadd.f32 %v372, %v342
      %v810 = vadd.f32 %v373, %v343
      %vm811 = vcmp.gt.f32.partialorder %v806, %v805
      %v812 = vsel %vm811, %v806, %v805
      %v813 = vsel %vm811, 1, 0
      %vm814 = vcmp.gt.f32.partialorder %v808, %v807
      %v815 = vsel %vm814, %v808, %v807
      %v816 = vsel %vm814, 3, 2
      %vm817 = vcmp.gt.f32.partialorder %v810, %v809
      %v818 = vsel %vm817, %v810, %v809
      %v819 = vsel %vm817, 5, 4
      %vm820 = vcmp.gt.f32.partialorder %v815, %v812
      %v821 = vsel %vm820, %v815, %v812
      %v822 = vsel %vm820, %v816, %v813
      %vm823 = vcmp.gt.f32.partialorder %v818, %v821
      %v824 = vsel %vm823, %v819, %v822
      %825 = vst [vmem:[#allocation13] sm:$0xff] 0
      // While loop
      $region41: #{tpu_custom_call.1} parent=32 // loop_pre_header
        _
      $region42: #{tpu_custom_call.1} parent=32 // loop_header
        %s827 = sphi 0, %s829
        %p828 = scmp.ge.s32.totalorder %s827, %s295
        %v832 = vphi %v824, %v873
      $region43: #{tpu_custom_call.1} parent=32 // loop_header_branch
        %831 = sbr.rel (%p828) target = $region47
      $region44: #{tpu_custom_call.1} parent=32 // loop_body
        %s833 = ssub.s32 %s295, 1
        %s834 = ssub.s32 %s833, %s827
        %s835 = smul.u32 %s834, 128
        %v836 = vstv %s834
        %vm837 = vcmp.lt.s32.totalorder %v836, %v294
        %v838 = vsub.s32 %v294, 1
        %vm839 = vcmp.eq.s32.totalorder %v836, %v838
        %v840 = vsel %vm839, %v824, %v832
        %v841 = vsel %vm837, %v840, 0
        %s842 = sshra.s32 %s835, 7
        %s843 = sand.u32 %s835, 127
        %s844 = scalar_lea.vmem [#allocation13], %s842
        %v845 = vlaneseq
        %vm846 = vcmp.ge.s32.totalorder %v845, 0
        %vm847 = vcmp.lt.s32.totalorder %v845, 128
        %vm848 = vmand %vm846, %vm847
        %849 = vst.msk [vmem:[%s844] sm:$0x1] %vm848, %v841
        %s850 = smul.addr %s842, 8
        %s851 = scalar_lea.vmem [#allocation2], %s850
        %v852 = vld [vmem:[%s851] ss:$0 sm:$0xff]
        %vm853 = vcmp.eq.s32.totalorder %v840, 1
        %v854 = vld [vmem:[%s851 + $0x1] ss:$0 sm:$0xff]
        %v855 = vsel %vm853, %v854, %v852
        %vm856 = vcmp.eq.s32.totalorder %v840, 2
        %v857 = vld [vmem:[%s851 + $0x2] ss:$0 sm:$0xff]
        %v858 = vsel %vm856, %v857, %v855
        %vm859 = vcmp.eq.s32.totalorder %v840, 3
        %v860 = vld [vmem:[%s851 + $0x3] ss:$0 sm:$0xff]
        %v861 = vsel %vm859, %v860, %v858
        %vm862 = vcmp.eq.s32.totalorder %v840, 4
        %v863 = vld [vmem:[%s851 + $0x4] ss:$0 sm:$0xff]
        %v864 = vsel %vm862, %v863, %v861
        %vm865 = vcmp.eq.s32.totalorder %v840, 5
        %v866 = vld [vmem:[%s851 + $0x5] ss:$0 sm:$0xff]
        %v867 = vsel %vm865, %v866, %v864
        %p868 = scmp.ge.s32.totalorder %s834, 1
        %s869 = scalar_select %p868, 1, 0
        %v870 = vstv %s869
        %vm871 = vcmp.eq.s32.totalorder %v870, 1
        %vm872 = vmand %vm837, %vm871
        %v873 = vsel %vm872, %v867, %v840
      $region45: #{tpu_custom_call.1} parent=32 // loop_footer
        %s829 = sadd.s32 %s827, 1
      $region46: #{tpu_custom_call.1} parent=32 // loop_footer_branch
        %826 = sbr.rel target = $region42
      $region47: #{tpu_custom_call.1} parent=32 // loop_exit
        _
    $region33: #{tpu_custom_call.1} parent=1 // pred_fallthru
      _
    // Predicated region
    $region48: #{tpu_custom_call.1} parent=1 // pred_check
      _
    $region49: #{tpu_custom_call.1} parent=1 // pred_check_branch
      %875 = sbr.rel (0) target = $region51
    $region50: #{tpu_custom_call.1} parent=1 // pred_region
      %877 = vsyncadd [#allocation7], 0
      %s879 = sshll.u32 [#allocation10], 4
      %s880 = int_to_ptr.vmem [resolvable:$true] %s879
      %s881 = sshll.u32 %s6, 4
      %s882 = int_to_ptr.hbm [resolvable:$true] %s881
      %884 = dma.vmem_to_hbm [thread:$0]  %s880, 1024, %s882, [#allocation7]
    $region51: #{tpu_custom_call.1} parent=1 // pred_fallthru
      _
    // Predicated region
    $region52: #{tpu_custom_call.1} parent=1 // pred_check
      _
    $region53: #{tpu_custom_call.1} parent=1 // pred_check_branch
      %886 = sbr.rel (0) target = $region55
    $region54: #{tpu_custom_call.1} parent=1 // pred_region
      %888 = vsyncadd [#allocation12], 0
      %s890 = sshll.u32 [#allocation11], 4
      %s891 = int_to_ptr.vmem [resolvable:$true] %s890
      %s892 = sshll.u32 %s7, 4
      %s893 = int_to_ptr.hbm [resolvable:$true] %s892
      %895 = dma.vmem_to_hbm [thread:$0]  %s891, 16, %s893, [#allocation12]
    $region55: #{tpu_custom_call.1} parent=1 // pred_fallthru
      _
    // Predicated region
    $region56: #{tpu_custom_call.1} parent=1 // pred_check
      _
    $region57: #{tpu_custom_call.1} parent=1 // pred_check_branch
      %897 = sbr.rel (0) target = $region59
    $region58: #{tpu_custom_call.1} parent=1 // pred_region
      %899 = vsyncadd [#allocation12], 0
      %s901 = sshll.u32 [#allocation13], 4
      %s902 = int_to_ptr.vmem [resolvable:$true] %s901
      %s903 = sshll.u32 %s8, 4
      %s904 = int_to_ptr.hbm [resolvable:$true] %s903
      %906 = dma.vmem_to_hbm [thread:$0]  %s902, 128, %s904, [#allocation12]
    $region59: #{tpu_custom_call.1} parent=1 // pred_fallthru
      _
    // Predicated region
    $region60: #{tpu_custom_call.1} parent=1 // pred_check
      _
    $region61: #{tpu_custom_call.1} parent=1 // pred_check_branch
      %908 = sbr.rel (0) target = $region63
    $region62: #{tpu_custom_call.1} parent=1 // pred_region
      %910 = dma.done [#allocation7], 1024
    $region63: #{tpu_custom_call.1} parent=1 // pred_fallthru
      _
    // Predicated region
    $region64: #{tpu_custom_call.1} parent=1 // pred_check
      _
    $region65: #{tpu_custom_call.1} parent=1 // pred_check_branch
      %912 = sbr.rel (0) target = $region67
    $region66: #{tpu_custom_call.1} parent=1 // pred_region
      %914 = dma.done [#allocation12], 16
    $region67: #{tpu_custom_call.1} parent=1 // pred_fallthru
      _
    // Predicated region
    $region68: #{tpu_custom_call.1} parent=1 // pred_check
      _
    $region69: #{tpu_custom_call.1} parent=1 // pred_check_branch
      %916 = sbr.rel (0) target = $region71
    $region70: #{tpu_custom_call.1} parent=1 // pred_region
      %918 = dma.done [#allocation12], 128
    $region71: #{tpu_custom_call.1} parent=1 // pred_fallthru
      _
    %919 = vsyncpa [#allocation6], 1
    %920 = vsyncpa [#allocation9], 1
    %921 = vsyncpa [#allocation7], 1
    %922 = vsyncpa [#allocation12], 1

</llo_original>
